<compile_context>
chip_gen: v5e
topology: v5e:2x2
jax: 0.10.0
libtpu: 0.0.40
codegen_flags: <defaults>
</compile_context>

<pallas_src>
import jax
import jax.numpy as jnp
from jax.experimental import pallas as pl
from jax.experimental.pallas import tpu as pltpu


def npp_kernel(x_ref, w1_ref, b1_ref, w2_ref, b2_ref, base_ref, u_ref, out_ref):
    eps = 1e-7
    x = x_ref[...].astype(jnp.float32)                        # (TN, F), bf16 -> f32

    # Linear(F -> 64), computed transposed so event rows land on lanes:
    # h[c, n] = sum_f W1[c, f] * x[n, f]   (MXU, "A @ B.T" contraction)
    h = jax.lax.dot_general(
        w1_ref[...], x,
        dimension_numbers=(((1,), (1,)), ((), ())),
        preferred_element_type=jnp.float32,
    )                                                         # (64, TN)
    h = h + b1_ref[...]                                       # (64, 1) lane-broadcast
    h = h * (1.0 / (1.0 + jnp.exp(-h)))                       # SiLU

    # Linear(64 -> 1): broadcast multiply + sublane reduction instead of a
    # 1-lane-wide MXU matmul; keeps the tail lane-dense.
    z = jnp.sum(h * w2_ref[...], axis=0, keepdims=True)       # (1, TN)
    z = z + b2_ref[0]                                         # SMEM scalar

    # Softplus (torch beta=1, threshold=20) + base_rate, clamp(min=1e-7).
    sp = jnp.where(z > 20.0, z, jnp.log1p(jnp.exp(jnp.minimum(z, 20.0))))
    intensity = jnp.maximum(sp + base_ref[0], eps)

    # u ~ U[0,1) rescaled to [eps, 1-eps);  predicted_delta = -log(u) / intensity.
    u = u_ref[...] * (1.0 - 2.0 * eps) + eps
    out_ref[...] = (-jnp.log(u) * pl.reciprocal(intensity, approx=True)).astype(out_ref.dtype)


def neural_point_process(e_tau, params, u_raw, *, tile_rows=4096):
    """e_tau: (N, F), any float dtype (bf16 recommended for HBM bandwidth).
    u_raw: (N,) uniform [0,1) randoms (stands in for torch.rand_like).
    Returns predicted deltas of shape (N,) (== predicted_delta.squeeze() for N>1).
    """
    N, F = e_tau.shape
    w1, b1, w2, b2, base = params
    H = w1.shape[0]
    assert tile_rows % 128 == 0, "tile_rows must be a multiple of 128 (lane width)"

    # Row tiling: block shapes equal full dims for small N, otherwise pad N up
    # to a multiple of the tile so every block is full (unmasked stores).
    if N <= tile_rows:
        TN, Np = N, N
    else:
        TN = tile_rows
        Np = pl.cdiv(N, TN) * TN
        if Np != N:
            e_tau = jnp.pad(e_tau, ((0, Np - N), (0, 0)))
            u_raw = jnp.pad(u_raw, (0, Np - N), constant_values=0.5)

    u2 = u_raw.reshape(1, Np).astype(jnp.float32)             # lane-dense randoms

    out = pl.pallas_call(
        npp_kernel,
        out_shape=jax.ShapeDtypeStruct((1, Np), jnp.float32),
        grid_spec=pltpu.PrefetchScalarGridSpec(
            num_scalar_prefetch=0,
            grid=(Np // TN,),
            in_specs=[
                pl.BlockSpec((TN, F), lambda i: (i, 0)),             # e_tau row tile
                pl.BlockSpec((H, F), lambda i: (0, 0)),              # W1 (torch layout)
                pl.BlockSpec((H, 1), lambda i: (0, 0)),              # b1 column
                pl.BlockSpec((H, 1), lambda i: (0, 0)),              # W2 column
                pl.BlockSpec(memory_space=pltpu.MemorySpace.SMEM),   # b2 scalar
                pl.BlockSpec(memory_space=pltpu.MemorySpace.SMEM),   # base_rate scalar
                pl.BlockSpec((1, TN), lambda i: (0, i)),             # u (lane-dense)
            ],
            out_specs=pl.BlockSpec((1, TN), lambda i: (0, i)),       # lane-dense output
        ),
        compiler_params=pltpu.CompilerParams(
            dimension_semantics=("parallel",),   # independent row tiles -> v7x dual-TC
        ),
    )(e_tau, w1, b1, w2, b2, base, u2)

    return out[0, :N]


def init_params(key, feature_dim, hidden=64):
    """Synthetic init matching the module's nn.Linear shapes.

    torch layout -> kernel layout:
      intensity_net[0].weight (64, F) -> w1 (64, F)   (lhs of the transposed matmul)
      intensity_net[0].bias   (64,)   -> b1 (64, 1)
      intensity_net[2].weight (1, 64) -> w2 (64, 1)   (column, for sublane reduce)
      intensity_net[2].bias   (1,)    -> b2 (1,)      (SMEM scalar)
      base_rate               ()      -> base (1,)    (SMEM scalar)
    """
    k1, k2, k3, k4 = jax.random.split(key, 4)
    bound1 = 1.0 / jnp.sqrt(jnp.float32(feature_dim))
    w1 = jax.random.uniform(k1, (hidden, feature_dim), jnp.float32, -bound1, bound1)
    b1 = jax.random.uniform(k2, (hidden, 1), jnp.float32, -bound1, bound1)
    bound2 = 1.0 / jnp.sqrt(jnp.float32(hidden))
    w2 = jax.random.uniform(k3, (hidden, 1), jnp.float32, -bound2, bound2)
    b2 = jax.random.uniform(k4, (1,), jnp.float32, -bound2, bound2)
    base = jnp.full((1,), 0.1, jnp.float32)                   # nn.Parameter(tensor(0.1))
    return w1, b1, w2, b2, base


if __name__ == "__main__":
    feature_dim = 32
    batch, seq = 8, 512                  # flattened -> N = 4096 event rows
    N = batch * seq

    key = jax.random.PRNGKey(0)
    k_x, k_p, k_u = jax.random.split(key, 3)

    e_tau_f32 = jax.random.normal(k_x, (N, feature_dim), jnp.float32)
    e_tau = e_tau_f32.astype(jnp.bfloat16)       # HBM-side dtype (bandwidth win)
    params = init_params(k_p, feature_dim)
    # Host-supplied uniforms stand in for torch.rand_like (deterministic check).
    u_raw = jax.random.uniform(k_u, (N,), jnp.float32)

    predicted_delta = neural_point_process(e_tau, params, u_raw, tile_rows=1024)
    jax.block_until_ready(predicted_delta)

    # Pure-JAX reference (same bf16-quantized input, f32 math).
    w1, b1, w2, b2, base = params
    x32 = e_tau.astype(jnp.float32)
    h = x32 @ w1.T + b1[:, 0]
    h = h * jax.nn.sigmoid(h)
    z = h @ w2 + b2[0]
    sp = jnp.where(z > 20.0, z, jnp.log1p(jnp.exp(jnp.minimum(z, 20.0))))
    inten = jnp.maximum(sp + base[0], 1e-7)
    u = u_raw[:, None] * (1.0 - 2e-7) + 1e-7
    ref = (-jnp.log(u) / inten)[:, 0]

    assert predicted_delta.shape == (N,)
    max_err = float(jnp.max(jnp.abs(predicted_delta - ref)))
    assert jnp.allclose(predicted_delta, ref, rtol=1e-2, atol=1e-3), max_err

    print("KERNEL_OK")
</pallas_src>

<mosaic_0001>
module attributes {stable_mosaic.version = 11 : i64} {
  func.func @npp_kernel(%arg0: i32, %arg1: memref<1024x32xbf16, #tpu.memory_space<vmem>>, %arg2: memref<64x32xf32, #tpu.memory_space<vmem>>, %arg3: memref<64x1xf32, #tpu.memory_space<vmem>>, %arg4: memref<64x1xf32, #tpu.memory_space<vmem>>, %arg5: memref<1xf32, #tpu.memory_space<smem>>, %arg6: memref<1xf32, #tpu.memory_space<smem>>, %arg7: memref<1x1024xf32, #tpu.memory_space<vmem>>, %arg8: memref<1x1024xf32, #tpu.memory_space<vmem>>) attributes {dimension_semantics = [#tpu.dimension_semantics<parallel>], iteration_bounds = array<i64: 4>, scalar_prefetch = 0 : i64, scratch_operands = 0 : i64, tpu.core_type = #tpu.core_type<tc>, window_params = [{transform_indices = @transform_0, window_bounds = array<i64: 1024, 32>}, {pipeline_mode = #tpu.pipeline_mode<synchronous>, transform_indices = @transform_1, window_bounds = array<i64: 64, 32>}, {pipeline_mode = #tpu.pipeline_mode<synchronous>, transform_indices = @transform_2, window_bounds = array<i64: 64, 1>}, {pipeline_mode = #tpu.pipeline_mode<synchronous>, transform_indices = @transform_3, window_bounds = array<i64: 64, 1>}, {transform_indices = @transform_4, window_bounds = array<i64: 1>}, {transform_indices = @transform_5, window_bounds = array<i64: 1>}, {transform_indices = @transform_6, window_bounds = array<i64: 1, 1024>}, {transform_indices = @transform_7, window_bounds = array<i64: 1, 1024>}]} {
    %c0 = arith.constant 0 : index
    %c0_0 = arith.constant 0 : index
    %0 = vector.load %arg1[%c0, %c0_0] : memref<1024x32xbf16, #tpu.memory_space<vmem>>, vector<1024x32xbf16>
    %1 = arith.extf %0 : vector<1024x32xbf16> to vector<1024x32xf32>
    %c0_1 = arith.constant 0 : index
    %c0_2 = arith.constant 0 : index
    %2 = vector.load %arg2[%c0_1, %c0_2] : memref<64x32xf32, #tpu.memory_space<vmem>>, vector<64x32xf32>
    %cst = arith.constant dense<0.000000e+00> : vector<64x1024xf32>
    %3 = tpu.matmul %2, %1, %cst {dimension_numbers = #tpu.dot_dimension_numbers<[1], [1], [0], [0], [0, 0, 1, 0], [], []>} : vector<64x32xf32>, vector<1024x32xf32>, vector<64x1024xf32> -> vector<64x1024xf32>
    %c0_3 = arith.constant 0 : index
    %c0_4 = arith.constant 0 : index
    %4 = vector.load %arg3[%c0_3, %c0_4] : memref<64x1xf32, #tpu.memory_space<vmem>>, vector<64x1xf32>
    %5 = vector.broadcast %4 : vector<64x1xf32> to vector<64x1024xf32>
    %6 = arith.addf %3, %5 : vector<64x1024xf32>
    %cst_5 = arith.constant 0.000000e+00 : f32
    %7 = vector.broadcast %cst_5 : f32 to vector<64x1024xf32>
    %8 = arith.subf %7, %6 : vector<64x1024xf32>
    %9 = math.exp %8 : vector<64x1024xf32>
    %cst_6 = arith.constant 1.000000e+00 : f32
    %10 = vector.broadcast %cst_6 : f32 to vector<64x1024xf32>
    %11 = arith.addf %10, %9 : vector<64x1024xf32>
    %cst_7 = arith.constant 1.000000e+00 : f32
    %12 = vector.broadcast %cst_7 : f32 to vector<64x1024xf32>
    %13 = arith.divf %12, %11 : vector<64x1024xf32>
    %14 = arith.mulf %6, %13 : vector<64x1024xf32>
    %c0_8 = arith.constant 0 : index
    %c0_9 = arith.constant 0 : index
    %15 = vector.load %arg4[%c0_8, %c0_9] : memref<64x1xf32, #tpu.memory_space<vmem>>, vector<64x1xf32>
    %16 = vector.broadcast %15 : vector<64x1xf32> to vector<64x1024xf32>
    %17 = arith.mulf %14, %16 : vector<64x1024xf32>
    %cst_10 = arith.constant dense<0.000000e+00> : vector<1024xf32>
    %18 = vector.multi_reduction <add>, %17, %cst_10 [0] : vector<64x1024xf32> to vector<1024xf32>
    %19 = vector.shape_cast %18 : vector<1024xf32> to vector<1x1024xf32>
    %c0_11 = arith.constant 0 : index
    %20 = memref.load %arg5[%c0_11] : memref<1xf32, #tpu.memory_space<smem>>
    %21 = vector.broadcast %20 : f32 to vector<1x1024xf32>
    %22 = arith.addf %19, %21 : vector<1x1024xf32>
    %cst_12 = arith.constant 2.000000e+01 : f32
    %23 = vector.broadcast %cst_12 : f32 to vector<1x1024xf32>
    %24 = arith.cmpf ogt, %22, %23 : vector<1x1024xf32>
    %cst_13 = arith.constant 2.000000e+01 : f32
    %25 = vector.broadcast %cst_13 : f32 to vector<1x1024xf32>
    %26 = arith.minimumf %22, %25 : vector<1x1024xf32>
    %27 = math.exp %26 : vector<1x1024xf32>
    %28 = math.log1p %27 : vector<1x1024xf32>
    %29 = arith.select %24, %22, %28 : vector<1x1024xi1>, vector<1x1024xf32>
    %c0_14 = arith.constant 0 : index
    %30 = memref.load %arg6[%c0_14] : memref<1xf32, #tpu.memory_space<smem>>
    %31 = vector.broadcast %30 : f32 to vector<1x1024xf32>
    %32 = arith.addf %29, %31 : vector<1x1024xf32>
    %cst_15 = arith.constant 1.000000e-07 : f32
    %33 = vector.broadcast %cst_15 : f32 to vector<1x1024xf32>
    %34 = arith.maximumf %32, %33 : vector<1x1024xf32>
    %c0_16 = arith.constant 0 : index
    %c0_17 = arith.constant 0 : index
    %35 = vector.load %arg7[%c0_16, %c0_17] : memref<1x1024xf32, #tpu.memory_space<vmem>>, vector<1x1024xf32>
    %cst_18 = arith.constant 0.999999821 : f32
    %36 = vector.broadcast %cst_18 : f32 to vector<1x1024xf32>
    %37 = arith.mulf %35, %36 : vector<1x1024xf32>
    %cst_19 = arith.constant 1.000000e-07 : f32
    %38 = vector.broadcast %cst_19 : f32 to vector<1x1024xf32>
    %39 = arith.addf %37, %38 : vector<1x1024xf32>
    %40 = math.log %39 : vector<1x1024xf32>
    %cst_20 = arith.constant 0.000000e+00 : f32
    %41 = vector.broadcast %cst_20 : f32 to vector<1x1024xf32>
    %42 = arith.subf %41, %40 : vector<1x1024xf32>
    %43 = tpu.reciprocal %34 {approx = true} : vector<1x1024xf32> -> vector<1x1024xf32>
    %44 = arith.mulf %42, %43 : vector<1x1024xf32>
    %c0_21 = arith.constant 0 : index
    %c0_22 = arith.constant 0 : index
    %45 = vector.load %arg8[%c0_21, %c0_22] : memref<1x1024xf32, #tpu.memory_space<vmem>>, vector<1x1024xf32>
    tpu.vector_store %arg8[%c0_21, %c0_22], %44 {strides = array<i32>} : memref<1x1024xf32, #tpu.memory_space<vmem>>, vector<1x1024xf32>,
    return
  }
  func.func @transform_0(%arg0: i32) -> (i32, i32) {
    %c0_i32 = arith.constant 0 : i32
    %c0_i32_0 = arith.constant 0 : i32
    return %arg0, %c0_i32 : i32, i32
  }
  func.func @transform_1(%arg0: i32) -> (i32, i32) {
    %c0_i32 = arith.constant 0 : i32
    %c0_i32_0 = arith.constant 0 : i32
    %c0_i32_1 = arith.constant 0 : i32
    return %c0_i32, %c0_i32_0 : i32, i32
  }
  func.func @transform_2(%arg0: i32) -> (i32, i32) {
    %c0_i32 = arith.constant 0 : i32
    %c0_i32_0 = arith.constant 0 : i32
    %c0_i32_1 = arith.constant 0 : i32
    return %c0_i32, %c0_i32_0 : i32, i32
  }
  func.func @transform_3(%arg0: i32) -> (i32, i32) {
    %c0_i32 = arith.constant 0 : i32
    %c0_i32_0 = arith.constant 0 : i32
    %c0_i32_1 = arith.constant 0 : i32
    return %c0_i32, %c0_i32_0 : i32, i32
  }
  func.func @transform_4(%arg0: i32) -> i32 {
    %c0_i32 = arith.constant 0 : i32
    %c0_i32_0 = arith.constant 0 : i32
    return %c0_i32 : i32
  }
  func.func @transform_5(%arg0: i32) -> i32 {
    %c0_i32 = arith.constant 0 : i32
    %c0_i32_0 = arith.constant 0 : i32
    return %c0_i32 : i32
  }
  func.func @transform_6(%arg0: i32) -> (i32, i32) {
    %c0_i32 = arith.constant 0 : i32
    %c0_i32_0 = arith.constant 0 : i32
    return %c0_i32, %arg0 : i32, i32
  }
  func.func @transform_7(%arg0: i32) -> (i32, i32) {
    %c0_i32 = arith.constant 0 : i32
    %c0_i32_0 = arith.constant 0 : i32
    return %c0_i32, %arg0 : i32, i32
  }
}

</mosaic_0001>

<llo_original>
// kernel: tpu_custom_call.1
$region0: #{tpu_custom_call.1}
  #allocation0 [shape = 'u32[]', space=smem, size = 0x4, offset = 0x4, fixed_abs, tag = 'smem constant byte address 0x4 - core index']
  #allocation1 [shape = 'u32[72,128]{1,0:T(1,128)}', space=vmem, size = 0x9000, scoped, tag = 'internal scratch']
  #allocation2 [shape = 'f32[1]{0:T(128)S(6)}', space=smem, size = 0x200, scoped, tag = 'scoped memory for tpu_custom_call.1']
  #allocation3 [shape = 'f32[1]{0:T(128)S(6)}', space=smem, size = 0x200, scoped, tag = 'scoped memory for tpu_custom_call.1']
  %s0 = inlined_call_operand.vmem [shape: bf16[4096,32], index: 0, kind: input, shape index: {}]
  %s1 = inlined_call_operand.vmem [shape: f32[64,32], index: 1, kind: input, shape index: {}]
  %s2 = inlined_call_operand.vmem [shape: f32[64,1], index: 2, kind: input, shape index: {}]
  %s3 = inlined_call_operand.vmem [shape: f32[64,1], index: 3, kind: input, shape index: {}]
  %s4 = inlined_call_operand.<no memory space> [shape: f32[1], index: 4, kind: input, shape index: {}]
  %s5 = inlined_call_operand.<no memory space> [shape: f32[1], index: 5, kind: input, shape index: {}]
  %s6 = inlined_call_operand.vmem [shape: f32[1,4096], index: 6, kind: input, shape index: {}]
  %s7 = inlined_call_operand.hbm [shape: f32[1,4096], index: 7, kind: output, shape index: {}]
  %s8 = sld [smem:[#allocation0]]
  $region61: #{tpu_custom_call.1} parent=0
    _
  %s10 = ssub.s32 1, %s8
  %s11 = scalar_select 0, %s10, %s8
  %12 = sst [smem:[#allocation2]] %s4
  %13 = sst [smem:[#allocation3]] %s5
  $region1: #{tpu_custom_call.1} parent=0
    #allocation4 [shape = 'u8[8192]{0}', space=vmem, size = 0x2000, scoped, tag = 'output window, operand 0']
    #allocation5 [shape = 's32[2]{0}', space=sflag, size = 0x8, scoped, tag = 'scoped memory for tpu_custom_call.1']
    %14 = vsyncpa [#allocation5], 0
    %s15 = scalar_lea.sflag [#allocation5], 1
    %16 = vsyncpa %s15, 0
    loop: start=0, step=1, limit=6
    $region2: #{tpu_custom_call.1} parent=1 // loop_pre_header
      _
    $region3: #{tpu_custom_call.1} parent=1 // loop_header
      %s18 = sphi 0, %s22
      %p19 = scmp.ge.s32.totalorder %s18, 6
      %s28 = sphi 0, %s30
      %s31 = sphi 0, %s28
      %s32 = sphi 0, %s31
      %s48 = sphi 0, %s32
      %s52 = sphi 0, %s52
      %s54 = sphi 0, %s52
      %s55 = sphi 0, %s54
      %s69 = sphi 0, %s55
      %s73 = sphi 0, %s73
      %s75 = sphi 0, %s73
      %s76 = sphi 0, %s75
      %s90 = sphi 0, %s76
      %s94 = sphi 0, %s94
      %s96 = sphi 0, %s94
      %s97 = sphi 0, %s96
      %s111 = sphi 0, %s97
      %s115 = sphi 0, %s115
      %s117 = sphi 0, %s115
      %s118 = sphi 0, %s117
      %s132 = sphi 0, %s118
      %s136 = sphi 0, %s136
      %s138 = sphi 0, %s136
      %s139 = sphi 0, %s138
      %s153 = sphi 0, %s139
      %s159 = sphi 0, %s161
      %s162 = sphi 0, %s159
      %s163 = sphi 0, %s162
      %s179 = sphi 0, %s163
      %s185 = sphi 0, %s187
      %s188 = sphi 0, %s185
      %s189 = sphi 0, %s188
      %s205 = sphi 0, %s189
    $region4: #{tpu_custom_call.1} parent=1 // loop_header_branch
      %21 = sbr.rel (%p19) target = $region8
    $region5: #{tpu_custom_call.1} parent=1 // loop_body
      %s23 = ssub.s32 %s18, 1
      %s24 = ssub.s32 %s18, 2
      %s25 = sadd.s32 %s18, 1
      %s26 = ssub.s32 %s18, %s25
      %p27 = scmp.eq.s32.totalorder %s26, 0
      %s29 = sadd.s32 %s28, 1
      %s30 = scalar_select %p27, %s28, %s29
      %p33 = pneg %p27
      %p34 = scmp.eq.s32.totalorder %s18, 3
      %p35 = por %p33, %p34
      %p36 = scmp.ne.s32.totalorder %s28, %s31
      %p37 = scmp.eq.s32.totalorder %s18, 0
      %p38 = por %p36, %p37
      %p39 = scmp.ne.s32.totalorder %s28, %s31
      %p40 = scmp.eq.s32.totalorder %s23, 3
      %p41 = por %p39, %p40
      %p42 = scmp.ne.s32.totalorder %s31, %s32
      %p43 = scmp.eq.s32.totalorder %s23, 0
      %p44 = por %p42, %p43
      %p45 = scmp.ne.s32.totalorder %s31, %s32
      %p46 = scmp.eq.s32.totalorder %s24, 3
      %p47 = por %p45, %p46
      %p49 = scmp.ne.s32.totalorder %s32, %s48
      %p50 = scmp.eq.s32.totalorder %s24, 0
      %p51 = por %p49, %p50
      %s53 = sadd.s32 %s52, 1
      %p56 = scmp.eq.s32.totalorder %s18, 3
      %p57 = scmp.ne.s32.totalorder %s52, %s54
      %p58 = scmp.eq.s32.totalorder %s18, 0
      %p59 = por %p57, %p58
      %p60 = scmp.ne.s32.totalorder %s52, %s54
      %p61 = scmp.eq.s32.totalorder %s23, 3
      %p62 = por %p60, %p61
      %p63 = scmp.ne.s32.totalorder %s54, %s55
      %p64 = scmp.eq.s32.totalorder %s23, 0
      %p65 = por %p63, %p64
      %p66 = scmp.ne.s32.totalorder %s54, %s55
      %p67 = scmp.eq.s32.totalorder %s24, 3
      %p68 = por %p66, %p67
      %p70 = scmp.ne.s32.totalorder %s55, %s69
      %p71 = scmp.eq.s32.totalorder %s24, 0
      %p72 = por %p70, %p71
      %s74 = sadd.s32 %s73, 1
      %p77 = scmp.eq.s32.totalorder %s18, 3
      %p78 = scmp.ne.s32.totalorder %s73, %s75
      %p79 = scmp.eq.s32.totalorder %s18, 0
      %p80 = por %p78, %p79
      %p81 = scmp.ne.s32.totalorder %s73, %s75
      %p82 = scmp.eq.s32.totalorder %s23, 3
      %p83 = por %p81, %p82
      %p84 = scmp.ne.s32.totalorder %s75, %s76
      %p85 = scmp.eq.s32.totalorder %s23, 0
      %p86 = por %p84, %p85
      %p87 = scmp.ne.s32.totalorder %s75, %s76
      %p88 = scmp.eq.s32.totalorder %s24, 3
      %p89 = por %p87, %p88
      %p91 = scmp.ne.s32.totalorder %s76, %s90
      %p92 = scmp.eq.s32.totalorder %s24, 0
      %p93 = por %p91, %p92
      %s95 = sadd.s32 %s94, 1
      %p98 = scmp.eq.s32.totalorder %s18, 3
      %p99 = scmp.ne.s32.totalorder %s94, %s96
      %p100 = scmp.eq.s32.totalorder %s18, 0
      %p101 = por %p99, %p100
      %p102 = scmp.ne.s32.totalorder %s94, %s96
      %p103 = scmp.eq.s32.totalorder %s23, 3
      %p104 = por %p102, %p103
      %p105 = scmp.ne.s32.totalorder %s96, %s97
      %p106 = scmp.eq.s32.totalorder %s23, 0
      %p107 = por %p105, %p106
      %p108 = scmp.ne.s32.totalorder %s96, %s97
      %p109 = scmp.eq.s32.totalorder %s24, 3
      %p110 = por %p108, %p109
      %p112 = scmp.ne.s32.totalorder %s97, %s111
      %p113 = scmp.eq.s32.totalorder %s24, 0
      %p114 = por %p112, %p113
      %s116 = sadd.s32 %s115, 1
      %p119 = scmp.eq.s32.totalorder %s18, 3
      %p120 = scmp.ne.s32.totalorder %s115, %s117
      %p121 = scmp.eq.s32.totalorder %s18, 0
      %p122 = por %p120, %p121
      %p123 = scmp.ne.s32.totalorder %s115, %s117
      %p124 = scmp.eq.s32.totalorder %s23, 3
      %p125 = por %p123, %p124
      %p126 = scmp.ne.s32.totalorder %s117, %s118
      %p127 = scmp.eq.s32.totalorder %s23, 0
      %p128 = por %p126, %p127
      %p129 = scmp.ne.s32.totalorder %s117, %s118
      %p130 = scmp.eq.s32.totalorder %s24, 3
      %p131 = por %p129, %p130
      %p133 = scmp.ne.s32.totalorder %s118, %s132
      %p134 = scmp.eq.s32.totalorder %s24, 0
      %p135 = por %p133, %p134
      %s137 = sadd.s32 %s136, 1
      %p140 = scmp.eq.s32.totalorder %s18, 3
      %p141 = scmp.ne.s32.totalorder %s136, %s138
      %p142 = scmp.eq.s32.totalorder %s18, 0
      %p143 = por %p141, %p142
      %p144 = scmp.ne.s32.totalorder %s136, %s138
      %p145 = scmp.eq.s32.totalorder %s23, 3
      %p146 = por %p144, %p145
      %p147 = scmp.ne.s32.totalorder %s138, %s139
      %p148 = scmp.eq.s32.totalorder %s23, 0
      %p149 = por %p147, %p148
      %p150 = scmp.ne.s32.totalorder %s138, %s139
      %p151 = scmp.eq.s32.totalorder %s24, 3
      %p152 = por %p150, %p151
      %p154 = scmp.ne.s32.totalorder %s139, %s153
      %p155 = scmp.eq.s32.totalorder %s24, 0
      %p156 = por %p154, %p155
      %s157 = ssub.s32 %s18, %s25
      %p158 = scmp.eq.s32.totalorder %s157, 0
      %s160 = sadd.s32 %s159, 1
      %s161 = scalar_select %p158, %s159, %s160
      %p164 = pneg %p158
      %p165 = scmp.eq.s32.totalorder %s18, 3
      %p166 = por %p164, %p165
      %p167 = scmp.ne.s32.totalorder %s159, %s162
      %p168 = scmp.eq.s32.totalorder %s18, 0
      %p169 = por %p167, %p168
      %p170 = scmp.ne.s32.totalorder %s159, %s162
      %p171 = scmp.eq.s32.totalorder %s23, 3
      %p172 = por %p170, %p171
      %p173 = scmp.ne.s32.totalorder %s162, %s163
      %p174 = scmp.eq.s32.totalorder %s23, 0
      %p175 = por %p173, %p174
      %p176 = scmp.ne.s32.totalorder %s162, %s163
      %p177 = scmp.eq.s32.totalorder %s24, 3
      %p178 = por %p176, %p177
      %p180 = scmp.ne.s32.totalorder %s163, %s179
      %p181 = scmp.eq.s32.totalorder %s24, 0
      %p182 = por %p180, %p181
      %s183 = ssub.s32 %s18, %s25
      %p184 = scmp.eq.s32.totalorder %s183, 0
      %s186 = sadd.s32 %s185, 1
      %s187 = scalar_select %p184, %s185, %s186
      %p190 = pneg %p184
      %p191 = scmp.eq.s32.totalorder %s18, 3
      %p192 = por %p190, %p191
      %p193 = scmp.ne.s32.totalorder %s185, %s188
      %p194 = scmp.eq.s32.totalorder %s18, 0
      %p195 = por %p193, %p194
      %p196 = scmp.ne.s32.totalorder %s185, %s188
      %p197 = scmp.eq.s32.totalorder %s23, 3
      %p198 = por %p196, %p197
      %p199 = scmp.ne.s32.totalorder %s188, %s189
      %p200 = scmp.eq.s32.totalorder %s23, 0
      %p201 = por %p199, %p200
      %p202 = scmp.ne.s32.totalorder %s188, %s189
      %p203 = scmp.eq.s32.totalorder %s24, 3
      %p204 = por %p202, %p203
      %p206 = scmp.ne.s32.totalorder %s189, %s205
      %p207 = scmp.eq.s32.totalorder %s24, 0
      %p208 = por %p206, %p207
      %p209 = scmp.le.s32.totalorder 1, %s18
      %p210 = scmp.lt.s32.totalorder %s18, 5
      %p211 = pnand %p209, %p210
      %p212 = pneg %p211
      // Predicated region
      $region9: #{tpu_custom_call.1} parent=5 // pred_check
        _
      $region10: #{tpu_custom_call.1} parent=5 // pred_check_branch
        %214 = sbr.rel (%p211) target = $region12
      $region11: #{tpu_custom_call.1} parent=5 // pred_region
        %s215 = ssub.s32 %s18, 1
        // Predicated region
        $region13: #{tpu_custom_call.1} parent=11 // pred_check
          %p216 = pneg %p65
        $region14: #{tpu_custom_call.1} parent=11 // pred_check_branch
          %218 = sbr.rel (%p216) target = $region16
        $region15: #{tpu_custom_call.1} parent=11 // pred_region
          _
        $region16: #{tpu_custom_call.1} parent=11 // pred_fallthru
          _
        // Predicated region
        $region17: #{tpu_custom_call.1} parent=11 // pred_check
          %p219 = pneg %p86
        $region18: #{tpu_custom_call.1} parent=11 // pred_check_branch
          %221 = sbr.rel (%p219) target = $region20
        $region19: #{tpu_custom_call.1} parent=11 // pred_region
          _
        $region20: #{tpu_custom_call.1} parent=11 // pred_fallthru
          _
        // Predicated region
        $region21: #{tpu_custom_call.1} parent=11 // pred_check
          %p222 = pneg %p107
        $region22: #{tpu_custom_call.1} parent=11 // pred_check_branch
          %224 = sbr.rel (%p222) target = $region24
        $region23: #{tpu_custom_call.1} parent=11 // pred_region
          _
        $region24: #{tpu_custom_call.1} parent=11 // pred_fallthru
          _
        // Predicated region
        $region25: #{tpu_custom_call.1} parent=11 // pred_check
          %p225 = pneg %p128
        $region26: #{tpu_custom_call.1} parent=11 // pred_check_branch
          %227 = sbr.rel (%p225) target = $region28
        $region27: #{tpu_custom_call.1} parent=11 // pred_region
          _
        $region28: #{tpu_custom_call.1} parent=11 // pred_fallthru
          _
        // Predicated region
        $region29: #{tpu_custom_call.1} parent=11 // pred_check
          %p228 = pneg %p149
        $region30: #{tpu_custom_call.1} parent=11 // pred_check_branch
          %230 = sbr.rel (%p228) target = $region32
        $region31: #{tpu_custom_call.1} parent=11 // pred_region
          _
        $region32: #{tpu_custom_call.1} parent=11 // pred_fallthru
          _
      $region12: #{tpu_custom_call.1} parent=5 // pred_fallthru
        _
      %p231 = scmp.lt.s32.totalorder %s18, 4
      // Predicated region
      $region33: #{tpu_custom_call.1} parent=5 // pred_check
        %p232 = pneg %p231
      $region34: #{tpu_custom_call.1} parent=5 // pred_check_branch
        %234 = sbr.rel (%p232) target = $region36
      $region35: #{tpu_custom_call.1} parent=5 // pred_region
        // Predicated region
        $region37: #{tpu_custom_call.1} parent=35 // pred_check
          %p235 = pneg %p38
        $region38: #{tpu_custom_call.1} parent=35 // pred_check_branch
          %237 = sbr.rel (%p235) target = $region40
        $region39: #{tpu_custom_call.1} parent=35 // pred_region
          %s238 = smul.u32 128, %s18
          %p239 = scmp.lt.s32.totalorder %s238, 511
          %s240 = scalar_select %p239, %s238, 511
          %s241 = smul.addr %s240, 4
          %s242 = scalar_lea.vmem %s0, %s241
          %s243 = smul.u32 128, %s18
        $region40: #{tpu_custom_call.1} parent=35 // pred_fallthru
          _
        // Predicated region
        $region41: #{tpu_custom_call.1} parent=35 // pred_check
          %p244 = pneg %p169
        $region42: #{tpu_custom_call.1} parent=35 // pred_check_branch
          %246 = sbr.rel (%p244) target = $region44
        $region43: #{tpu_custom_call.1} parent=35 // pred_region
          %s247 = smul.u32 8, %s18
          %p248 = scmp.lt.s32.totalorder %s247, 31
          %s249 = scalar_select %p248, %s247, 31
          %s250 = scalar_lea.vmem %s6, %s249
          %s251 = smul.u32 8, %s18
        $region44: #{tpu_custom_call.1} parent=35 // pred_fallthru
          _
      $region36: #{tpu_custom_call.1} parent=5 // pred_fallthru
        _
      %p252 = scmp.le.s32.totalorder 1, %s18
      %p253 = scmp.lt.s32.totalorder %s18, 5
      %p254 = pnand %p252, %p253
      %p255 = pneg %p254
      // Predicated region
      $region45: #{tpu_custom_call.1} parent=5 // pred_check
        _
      $region46: #{tpu_custom_call.1} parent=5 // pred_check_branch
        %257 = sbr.rel (%p254) target = $region48
      $region47: #{tpu_custom_call.1} parent=5 // pred_region
        %s258 = ssub.s32 %s18, 1
        %s259 = smul.u32 128, %s23
        %p260 = scmp.lt.s32.totalorder %s259, 511
        %s261 = scalar_select %p260, %s259, 511
        %s262 = smul.addr %s261, 4
        %s263 = scalar_lea.vmem %s0, %s262
        %p264 = pneg %p44
        %p265 = pneg %p41
        %p266 = pneg %p65
        %p267 = pneg %p62
        %p268 = pneg %p86
        %p269 = pneg %p83
        %p270 = pneg %p107
        %p271 = pneg %p104
        %p272 = pneg %p128
        %p273 = pneg %p125
        %p274 = pneg %p149
        %p275 = pneg %p146
        %s276 = smul.u32 8, %s23
        %p277 = scmp.lt.s32.totalorder %s276, 31
        %s278 = scalar_select %p277, %s276, 31
        %s279 = scalar_lea.vmem %s6, %s278
        %p280 = pneg %p175
        %p281 = pneg %p172
        %p282 = pneg %p201
        %p283 = pneg %p198
        %s284 = sand.u32 %s188, 1
        %s285 = scalar_lea.sflag [#allocation5], %s284
        %s286 = sand.u32 %s188, 1
        %s287 = smul.addr %s286, 8
        %s288 = scalar_lea.vmem [#allocation4], %s287
        %s289 = smul.u32 128, %s23
        %p290 = scmp.lt.s32.totalorder %s289, 511
        %s291 = scalar_select %p290, %s289, 511
        %s292 = smul.addr %s291, 4
        %s293 = scalar_lea.vmem %s0, %s292
        %s294 = smul.u32 128, %s23
        %s295 = smul.u32 8, %s23
        %p296 = scmp.lt.s32.totalorder %s295, 31
        %s297 = scalar_select %p296, %s295, 31
        %s298 = scalar_lea.vmem %s6, %s297
        %s299 = smul.u32 8, %s23
        %s300 = smul.u32 8, %s23
        %v301 = vld [vmem:[%s293] sm:$0xf]
        %v302 = vld [vmem:[%s293 + $0x4] sm:$0xf]
        %v303 = vld [vmem:[%s293 + $0x8] sm:$0xf]
        %v304 = vld [vmem:[%s293 + $0xc] sm:$0xf]
        %v305 = vld [vmem:[%s293 + $0x10] sm:$0xf]
        %v306 = vld [vmem:[%s293 + $0x14] sm:$0xf]
        %v307 = vld [vmem:[%s293 + $0x18] sm:$0xf]
        %v308 = vld [vmem:[%s293 + $0x1c] sm:$0xf]
        %v309 = vld [vmem:[%s293 + $0x20] sm:$0xf]
        %v310 = vld [vmem:[%s293 + $0x24] sm:$0xf]
        %v311 = vld [vmem:[%s293 + $0x28] sm:$0xf]
        %v312 = vld [vmem:[%s293 + $0x2c] sm:$0xf]
        %v313 = vld [vmem:[%s293 + $0x30] sm:$0xf]
        %v314 = vld [vmem:[%s293 + $0x34] sm:$0xf]
        %v315 = vld [vmem:[%s293 + $0x38] sm:$0xf]
        %v316 = vld [vmem:[%s293 + $0x3c] sm:$0xf]
        %v317 = vld [vmem:[%s293 + $0x40] sm:$0xf]
        %v318 = vld [vmem:[%s293 + $0x44] sm:$0xf]
        %v319 = vld [vmem:[%s293 + $0x48] sm:$0xf]
        %v320 = vld [vmem:[%s293 + $0x4c] sm:$0xf]
        %v321 = vld [vmem:[%s293 + $0x50] sm:$0xf]
        %v322 = vld [vmem:[%s293 + $0x54] sm:$0xf]
        %v323 = vld [vmem:[%s293 + $0x58] sm:$0xf]
        %v324 = vld [vmem:[%s293 + $0x5c] sm:$0xf]
        %v325 = vld [vmem:[%s293 + $0x60] sm:$0xf]
        %v326 = vld [vmem:[%s293 + $0x64] sm:$0xf]
        %v327 = vld [vmem:[%s293 + $0x68] sm:$0xf]
        %v328 = vld [vmem:[%s293 + $0x6c] sm:$0xf]
        %v329 = vld [vmem:[%s293 + $0x70] sm:$0xf]
        %v330 = vld [vmem:[%s293 + $0x74] sm:$0xf]
        %v331 = vld [vmem:[%s293 + $0x78] sm:$0xf]
        %v332 = vld [vmem:[%s293 + $0x7c] sm:$0xf]
        %v333 = vld [vmem:[%s293 + $0x80] sm:$0xf]
        %v334 = vld [vmem:[%s293 + $0x84] sm:$0xf]
        %v335 = vld [vmem:[%s293 + $0x88] sm:$0xf]
        %v336 = vld [vmem:[%s293 + $0x8c] sm:$0xf]
        %v337 = vld [vmem:[%s293 + $0x90] sm:$0xf]
        %v338 = vld [vmem:[%s293 + $0x94] sm:$0xf]
        %v339 = vld [vmem:[%s293 + $0x98] sm:$0xf]
        %v340 = vld [vmem:[%s293 + $0x9c] sm:$0xf]
        %v341 = vld [vmem:[%s293 + $0xa0] sm:$0xf]
        %v342 = vld [vmem:[%s293 + $0xa4] sm:$0xf]
        %v343 = vld [vmem:[%s293 + $0xa8] sm:$0xf]
        %v344 = vld [vmem:[%s293 + $0xac] sm:$0xf]
        %v345 = vld [vmem:[%s293 + $0xb0] sm:$0xf]
        %v346 = vld [vmem:[%s293 + $0xb4] sm:$0xf]
        %v347 = vld [vmem:[%s293 + $0xb8] sm:$0xf]
        %v348 = vld [vmem:[%s293 + $0xbc] sm:$0xf]
        %v349 = vld [vmem:[%s293 + $0xc0] sm:$0xf]
        %v350 = vld [vmem:[%s293 + $0xc4] sm:$0xf]
        %v351 = vld [vmem:[%s293 + $0xc8] sm:$0xf]
        %v352 = vld [vmem:[%s293 + $0xcc] sm:$0xf]
        %v353 = vld [vmem:[%s293 + $0xd0] sm:$0xf]
        %v354 = vld [vmem:[%s293 + $0xd4] sm:$0xf]
        %v355 = vld [vmem:[%s293 + $0xd8] sm:$0xf]
        %v356 = vld [vmem:[%s293 + $0xdc] sm:$0xf]
        %v357 = vld [vmem:[%s293 + $0xe0] sm:$0xf]
        %v358 = vld [vmem:[%s293 + $0xe4] sm:$0xf]
        %v359 = vld [vmem:[%s293 + $0xe8] sm:$0xf]
        %v360 = vld [vmem:[%s293 + $0xec] sm:$0xf]
        %v361 = vld [vmem:[%s293 + $0xf0] sm:$0xf]
        %v362 = vld [vmem:[%s293 + $0xf4] sm:$0xf]
        %v363 = vld [vmem:[%s293 + $0xf8] sm:$0xf]
        %v364 = vld [vmem:[%s293 + $0xfc] sm:$0xf]
        %v365 = vld [vmem:[%s293 + $0x100] sm:$0xf]
        %v366 = vld [vmem:[%s293 + $0x104] sm:$0xf]
        %v367 = vld [vmem:[%s293 + $0x108] sm:$0xf]
        %v368 = vld [vmem:[%s293 + $0x10c] sm:$0xf]
        %v369 = vld [vmem:[%s293 + $0x110] sm:$0xf]
        %v370 = vld [vmem:[%s293 + $0x114] sm:$0xf]
        %v371 = vld [vmem:[%s293 + $0x118] sm:$0xf]
        %v372 = vld [vmem:[%s293 + $0x11c] sm:$0xf]
        %v373 = vld [vmem:[%s293 + $0x120] sm:$0xf]
        %v374 = vld [vmem:[%s293 + $0x124] sm:$0xf]
        %v375 = vld [vmem:[%s293 + $0x128] sm:$0xf]
        %v376 = vld [vmem:[%s293 + $0x12c] sm:$0xf]
        %v377 = vld [vmem:[%s293 + $0x130] sm:$0xf]
        %v378 = vld [vmem:[%s293 + $0x134] sm:$0xf]
        %v379 = vld [vmem:[%s293 + $0x138] sm:$0xf]
        %v380 = vld [vmem:[%s293 + $0x13c] sm:$0xf]
        %v381 = vld [vmem:[%s293 + $0x140] sm:$0xf]
        %v382 = vld [vmem:[%s293 + $0x144] sm:$0xf]
        %v383 = vld [vmem:[%s293 + $0x148] sm:$0xf]
        %v384 = vld [vmem:[%s293 + $0x14c] sm:$0xf]
        %v385 = vld [vmem:[%s293 + $0x150] sm:$0xf]
        %v386 = vld [vmem:[%s293 + $0x154] sm:$0xf]
        %v387 = vld [vmem:[%s293 + $0x158] sm:$0xf]
        %v388 = vld [vmem:[%s293 + $0x15c] sm:$0xf]
        %v389 = vld [vmem:[%s293 + $0x160] sm:$0xf]
        %v390 = vld [vmem:[%s293 + $0x164] sm:$0xf]
        %v391 = vld [vmem:[%s293 + $0x168] sm:$0xf]
        %v392 = vld [vmem:[%s293 + $0x16c] sm:$0xf]
        %v393 = vld [vmem:[%s293 + $0x170] sm:$0xf]
        %v394 = vld [vmem:[%s293 + $0x174] sm:$0xf]
        %v395 = vld [vmem:[%s293 + $0x178] sm:$0xf]
        %v396 = vld [vmem:[%s293 + $0x17c] sm:$0xf]
        %v397 = vld [vmem:[%s293 + $0x180] sm:$0xf]
        %v398 = vld [vmem:[%s293 + $0x184] sm:$0xf]
        %v399 = vld [vmem:[%s293 + $0x188] sm:$0xf]
        %v400 = vld [vmem:[%s293 + $0x18c] sm:$0xf]
        %v401 = vld [vmem:[%s293 + $0x190] sm:$0xf]
        %v402 = vld [vmem:[%s293 + $0x194] sm:$0xf]
        %v403 = vld [vmem:[%s293 + $0x198] sm:$0xf]
        %v404 = vld [vmem:[%s293 + $0x19c] sm:$0xf]
        %v405 = vld [vmem:[%s293 + $0x1a0] sm:$0xf]
        %v406 = vld [vmem:[%s293 + $0x1a4] sm:$0xf]
        %v407 = vld [vmem:[%s293 + $0x1a8] sm:$0xf]
        %v408 = vld [vmem:[%s293 + $0x1ac] sm:$0xf]
        %v409 = vld [vmem:[%s293 + $0x1b0] sm:$0xf]
        %v410 = vld [vmem:[%s293 + $0x1b4] sm:$0xf]
        %v411 = vld [vmem:[%s293 + $0x1b8] sm:$0xf]
        %v412 = vld [vmem:[%s293 + $0x1bc] sm:$0xf]
        %v413 = vld [vmem:[%s293 + $0x1c0] sm:$0xf]
        %v414 = vld [vmem:[%s293 + $0x1c4] sm:$0xf]
        %v415 = vld [vmem:[%s293 + $0x1c8] sm:$0xf]
        %v416 = vld [vmem:[%s293 + $0x1cc] sm:$0xf]
        %v417 = vld [vmem:[%s293 + $0x1d0] sm:$0xf]
        %v418 = vld [vmem:[%s293 + $0x1d4] sm:$0xf]
        %v419 = vld [vmem:[%s293 + $0x1d8] sm:$0xf]
        %v420 = vld [vmem:[%s293 + $0x1dc] sm:$0xf]
        %v421 = vld [vmem:[%s293 + $0x1e0] sm:$0xf]
        %v422 = vld [vmem:[%s293 + $0x1e4] sm:$0xf]
        %v423 = vld [vmem:[%s293 + $0x1e8] sm:$0xf]
        %v424 = vld [vmem:[%s293 + $0x1ec] sm:$0xf]
        %v425 = vld [vmem:[%s293 + $0x1f0] sm:$0xf]
        %v426 = vld [vmem:[%s293 + $0x1f4] sm:$0xf]
        %v427 = vld [vmem:[%s293 + $0x1f8] sm:$0xf]
        %v428 = vld [vmem:[%s293 + $0x1fc] sm:$0xf]
        %v429 = vunpack.c.l.bf16 %v301
        %v430 = vunpack.c.l.bf16 %v302
        %v431 = vunpack.c.l.bf16 %v303
        %v432 = vunpack.c.l.bf16 %v304
        %v433 = vunpack.c.l.bf16 %v305
        %v434 = vunpack.c.l.bf16 %v306
        %v435 = vunpack.c.l.bf16 %v307
        %v436 = vunpack.c.l.bf16 %v308
        %v437 = vunpack.c.l.bf16 %v309
        %v438 = vunpack.c.l.bf16 %v310
        %v439 = vunpack.c.l.bf16 %v311
        %v440 = vunpack.c.l.bf16 %v312
        %v441 = vunpack.c.l.bf16 %v313
        %v442 = vunpack.c.l.bf16 %v314
        %v443 = vunpack.c.l.bf16 %v315
        %v444 = vunpack.c.l.bf16 %v316
        %v445 = vunpack.c.l.bf16 %v317
        %v446 = vunpack.c.l.bf16 %v318
        %v447 = vunpack.c.l.bf16 %v319
        %v448 = vunpack.c.l.bf16 %v320
        %v449 = vunpack.c.l.bf16 %v321
        %v450 = vunpack.c.l.bf16 %v322
        %v451 = vunpack.c.l.bf16 %v323
        %v452 = vunpack.c.l.bf16 %v324
        %v453 = vunpack.c.l.bf16 %v325
        %v454 = vunpack.c.l.bf16 %v326
        %v455 = vunpack.c.l.bf16 %v327
        %v456 = vunpack.c.l.bf16 %v328
        %v457 = vunpack.c.l.bf16 %v329
        %v458 = vunpack.c.l.bf16 %v330
        %v459 = vunpack.c.l.bf16 %v331
        %v460 = vunpack.c.l.bf16 %v332
        %v461 = vunpack.c.l.bf16 %v333
        %v462 = vunpack.c.l.bf16 %v334
        %v463 = vunpack.c.l.bf16 %v335
        %v464 = vunpack.c.l.bf16 %v336
        %v465 = vunpack.c.l.bf16 %v337
        %v466 = vunpack.c.l.bf16 %v338
        %v467 = vunpack.c.l.bf16 %v339
        %v468 = vunpack.c.l.bf16 %v340
        %v469 = vunpack.c.l.bf16 %v341
        %v470 = vunpack.c.l.bf16 %v342
        %v471 = vunpack.c.l.bf16 %v343
        %v472 = vunpack.c.l.bf16 %v344
        %v473 = vunpack.c.l.bf16 %v345
        %v474 = vunpack.c.l.bf16 %v346
        %v475 = vunpack.c.l.bf16 %v347
        %v476 = vunpack.c.l.bf16 %v348
        %v477 = vunpack.c.l.bf16 %v349
        %v478 = vunpack.c.l.bf16 %v350
        %v479 = vunpack.c.l.bf16 %v351
        %v480 = vunpack.c.l.bf16 %v352
        %v481 = vunpack.c.l.bf16 %v353
        %v482 = vunpack.c.l.bf16 %v354
        %v483 = vunpack.c.l.bf16 %v355
        %v484 = vunpack.c.l.bf16 %v356
        %v485 = vunpack.c.l.bf16 %v357
        %v486 = vunpack.c.l.bf16 %v358
        %v487 = vunpack.c.l.bf16 %v359
        %v488 = vunpack.c.l.bf16 %v360
        %v489 = vunpack.c.l.bf16 %v361
        %v490 = vunpack.c.l.bf16 %v362
        %v491 = vunpack.c.l.bf16 %v363
        %v492 = vunpack.c.l.bf16 %v364
        %v493 = vunpack.c.l.bf16 %v365
        %v494 = vunpack.c.l.bf16 %v366
        %v495 = vunpack.c.l.bf16 %v367
        %v496 = vunpack.c.l.bf16 %v368
        %v497 = vunpack.c.l.bf16 %v369
        %v498 = vunpack.c.l.bf16 %v370
        %v499 = vunpack.c.l.bf16 %v371
        %v500 = vunpack.c.l.bf16 %v372
        %v501 = vunpack.c.l.bf16 %v373
        %v502 = vunpack.c.l.bf16 %v374
        %v503 = vunpack.c.l.bf16 %v375
        %v504 = vunpack.c.l.bf16 %v376
        %v505 = vunpack.c.l.bf16 %v377
        %v506 = vunpack.c.l.bf16 %v378
        %v507 = vunpack.c.l.bf16 %v379
        %v508 = vunpack.c.l.bf16 %v380
        %v509 = vunpack.c.l.bf16 %v381
        %v510 = vunpack.c.l.bf16 %v382
        %v511 = vunpack.c.l.bf16 %v383
        %v512 = vunpack.c.l.bf16 %v384
        %v513 = vunpack.c.l.bf16 %v385
        %v514 = vunpack.c.l.bf16 %v386
        %v515 = vunpack.c.l.bf16 %v387
        %v516 = vunpack.c.l.bf16 %v388
        %v517 = vunpack.c.l.bf16 %v389
        %v518 = vunpack.c.l.bf16 %v390
        %v519 = vunpack.c.l.bf16 %v391
        %v520 = vunpack.c.l.bf16 %v392
        %v521 = vunpack.c.l.bf16 %v393
        %v522 = vunpack.c.l.bf16 %v394
        %v523 = vunpack.c.l.bf16 %v395
        %v524 = vunpack.c.l.bf16 %v396
        %v525 = vunpack.c.l.bf16 %v397
        %v526 = vunpack.c.l.bf16 %v398
        %v527 = vunpack.c.l.bf16 %v399
        %v528 = vunpack.c.l.bf16 %v400
        %v529 = vunpack.c.l.bf16 %v401
        %v530 = vunpack.c.l.bf16 %v402
        %v531 = vunpack.c.l.bf16 %v403
        %v532 = vunpack.c.l.bf16 %v404
        %v533 = vunpack.c.l.bf16 %v405
        %v534 = vunpack.c.l.bf16 %v406
        %v535 = vunpack.c.l.bf16 %v407
        %v536 = vunpack.c.l.bf16 %v408
        %v537 = vunpack.c.l.bf16 %v409
        %v538 = vunpack.c.l.bf16 %v410
        %v539 = vunpack.c.l.bf16 %v411
        %v540 = vunpack.c.l.bf16 %v412
        %v541 = vunpack.c.l.bf16 %v413
        %v542 = vunpack.c.l.bf16 %v414
        %v543 = vunpack.c.l.bf16 %v415
        %v544 = vunpack.c.l.bf16 %v416
        %v545 = vunpack.c.l.bf16 %v417
        %v546 = vunpack.c.l.bf16 %v418
        %v547 = vunpack.c.l.bf16 %v419
        %v548 = vunpack.c.l.bf16 %v420
        %v549 = vunpack.c.l.bf16 %v421
        %v550 = vunpack.c.l.bf16 %v422
        %v551 = vunpack.c.l.bf16 %v423
        %v552 = vunpack.c.l.bf16 %v424
        %v553 = vunpack.c.l.bf16 %v425
        %v554 = vunpack.c.l.bf16 %v426
        %v555 = vunpack.c.l.bf16 %v427
        %v556 = vunpack.c.l.bf16 %v428
        %v557 = vld [vmem:[%s1] sm:$0xff]
        %v558 = vld [vmem:[%s1 + $0x8] sm:$0xff]
        %v559 = vld [vmem:[%s1 + $0x10] sm:$0xff]
        %v560 = vld [vmem:[%s1 + $0x18] sm:$0xff]
        %v561 = vld [vmem:[%s1 + $0x20] sm:$0xff]
        %v562 = vld [vmem:[%s1 + $0x28] sm:$0xff]
        %v563 = vld [vmem:[%s1 + $0x30] sm:$0xff]
        %v564 = vld [vmem:[%s1 + $0x38] sm:$0xff]
        %v565 = vld [vmem:[%s2] sm:$0xff]
        %v566 = vld [vmem:[%s2 + $0x8] sm:$0xff]
        %v567 = vld [vmem:[%s2 + $0x10] sm:$0xff]
        %v568 = vld [vmem:[%s2 + $0x18] sm:$0xff]
        %v569 = vld [vmem:[%s2 + $0x20] sm:$0xff]
        %v570 = vld [vmem:[%s2 + $0x28] sm:$0xff]
        %v571 = vld [vmem:[%s2 + $0x30] sm:$0xff]
        %v572 = vld [vmem:[%s2 + $0x38] sm:$0xff]
        %574 = vset.pattern.permute.xlu0 0
        %575 = vperm.xlu0 %574, %v565
        %v576 = vpop.permute.xlu0 %575
        %579 = vset.pattern.permute.xlu0 0
        %580 = vperm.xlu0 %579, %v566
        %v581 = vpop.permute.xlu0 %580
        %584 = vset.pattern.permute.xlu0 0
        %585 = vperm.xlu0 %584, %v567
        %v586 = vpop.permute.xlu0 %585
        %589 = vset.pattern.permute.xlu0 0
        %590 = vperm.xlu0 %589, %v568
        %v591 = vpop.permute.xlu0 %590
        %594 = vset.pattern.permute.xlu0 0
        %595 = vperm.xlu0 %594, %v569
        %v596 = vpop.permute.xlu0 %595
        %599 = vset.pattern.permute.xlu0 0
        %600 = vperm.xlu0 %599, %v570
        %v601 = vpop.permute.xlu0 %600
        %604 = vset.pattern.permute.xlu0 0
        %605 = vperm.xlu0 %604, %v571
        %v606 = vpop.permute.xlu0 %605
        %609 = vset.pattern.permute.xlu0 0
        %610 = vperm.xlu0 %609, %v572
        %v611 = vpop.permute.xlu0 %610
        %vm613 = vcmask 261120
        %v615 = vsel %vm613, %v557, 0
        %v618 = vsel %vm613, %v558, 0
        %v621 = vsel %vm613, %v559, 0
        %v624 = vsel %vm613, %v560, 0
        %v627 = vsel %vm613, %v561, 0
        %v630 = vsel %vm613, %v562, 0
        %v633 = vsel %vm613, %v563, 0
        %v636 = vsel %vm613, %v564, 0
        %v639 = vsel %vm613, %v429, 0
        %v642 = vsel %vm613, %v430, 0
        %v645 = vsel %vm613, %v431, 0
        %v648 = vsel %vm613, %v432, 0
        %v651 = vsel %vm613, %v433, 0
        %v654 = vsel %vm613, %v434, 0
        %v657 = vsel %vm613, %v435, 0
        %v660 = vsel %vm613, %v436, 0
        %v663 = vsel %vm613, %v437, 0
        %v666 = vsel %vm613, %v438, 0
        %v669 = vsel %vm613, %v439, 0
        %v672 = vsel %vm613, %v440, 0
        %v675 = vsel %vm613, %v441, 0
        %v678 = vsel %vm613, %v442, 0
        %v681 = vsel %vm613, %v443, 0
        %v684 = vsel %vm613, %v444, 0
        %v687 = vsel %vm613, %v445, 0
        %v690 = vsel %vm613, %v446, 0
        %v693 = vsel %vm613, %v447, 0
        %v696 = vsel %vm613, %v448, 0
        %v699 = vsel %vm613, %v449, 0
        %v702 = vsel %vm613, %v450, 0
        %v705 = vsel %vm613, %v451, 0
        %v708 = vsel %vm613, %v452, 0
        %v711 = vsel %vm613, %v453, 0
        %v714 = vsel %vm613, %v454, 0
        %v717 = vsel %vm613, %v455, 0
        %v720 = vsel %vm613, %v456, 0
        %v723 = vsel %vm613, %v457, 0
        %v726 = vsel %vm613, %v458, 0
        %v729 = vsel %vm613, %v459, 0
        %v732 = vsel %vm613, %v460, 0
        %v735 = vsel %vm613, %v461, 0
        %v738 = vsel %vm613, %v462, 0
        %v741 = vsel %vm613, %v463, 0
        %v744 = vsel %vm613, %v464, 0
        %v747 = vsel %vm613, %v465, 0
        %v750 = vsel %vm613, %v466, 0
        %v753 = vsel %vm613, %v467, 0
        %v756 = vsel %vm613, %v468, 0
        %v759 = vsel %vm613, %v469, 0
        %v762 = vsel %vm613, %v470, 0
        %v765 = vsel %vm613, %v471, 0
        %v768 = vsel %vm613, %v472, 0
        %v771 = vsel %vm613, %v473, 0
        %v774 = vsel %vm613, %v474, 0
        %v777 = vsel %vm613, %v475, 0
        %v780 = vsel %vm613, %v476, 0
        %v783 = vsel %vm613, %v477, 0
        %v786 = vsel %vm613, %v478, 0
        %v789 = vsel %vm613, %v479, 0
        %v792 = vsel %vm613, %v480, 0
        %v795 = vsel %vm613, %v481, 0
        %v798 = vsel %vm613, %v482, 0
        %v801 = vsel %vm613, %v483, 0
        %v804 = vsel %vm613, %v484, 0
        %v807 = vsel %vm613, %v485, 0
        %v810 = vsel %vm613, %v486, 0
        %v813 = vsel %vm613, %v487, 0
        %v816 = vsel %vm613, %v488, 0
        %v819 = vsel %vm613, %v489, 0
        %v822 = vsel %vm613, %v490, 0
        %v825 = vsel %vm613, %v491, 0
        %v828 = vsel %vm613, %v492, 0
        %v831 = vsel %vm613, %v493, 0
        %v834 = vsel %vm613, %v494, 0
        %v837 = vsel %vm613, %v495, 0
        %v840 = vsel %vm613, %v496, 0
        %v843 = vsel %vm613, %v497, 0
        %v846 = vsel %vm613, %v498, 0
        %v849 = vsel %vm613, %v499, 0
        %v852 = vsel %vm613, %v500, 0
        %v855 = vsel %vm613, %v501, 0
        %v858 = vsel %vm613, %v502, 0
        %v861 = vsel %vm613, %v503, 0
        %v864 = vsel %vm613, %v504, 0
        %v867 = vsel %vm613, %v505, 0
        %v870 = vsel %vm613, %v506, 0
        %v873 = vsel %vm613, %v507, 0
        %v876 = vsel %vm613, %v508, 0
        %v879 = vsel %vm613, %v509, 0
        %v882 = vsel %vm613, %v510, 0
        %v885 = vsel %vm613, %v511, 0
        %v888 = vsel %vm613, %v512, 0
        %v891 = vsel %vm613, %v513, 0
        %v894 = vsel %vm613, %v514, 0
        %v897 = vsel %vm613, %v515, 0
        %v900 = vsel %vm613, %v516, 0
        %v903 = vsel %vm613, %v517, 0
        %v906 = vsel %vm613, %v518, 0
        %v909 = vsel %vm613, %v519, 0
        %v912 = vsel %vm613, %v520, 0
        %v915 = vsel %vm613, %v521, 0
        %v918 = vsel %vm613, %v522, 0
        %v921 = vsel %vm613, %v523, 0
        %v924 = vsel %vm613, %v524, 0
        %v927 = vsel %vm613, %v525, 0
        %v930 = vsel %vm613, %v526, 0
        %v933 = vsel %vm613, %v527, 0
        %v936 = vsel %vm613, %v528, 0
        %v939 = vsel %vm613, %v529, 0
        %v942 = vsel %vm613, %v530, 0
        %v945 = vsel %vm613, %v531, 0
        %v948 = vsel %vm613, %v532, 0
        %v951 = vsel %vm613, %v533, 0
        %v954 = vsel %vm613, %v534, 0
        %v957 = vsel %vm613, %v535, 0
        %v960 = vsel %vm613, %v536, 0
        %v963 = vsel %vm613, %v537, 0
        %v966 = vsel %vm613, %v538, 0
        %v969 = vsel %vm613, %v539, 0
        %v972 = vsel %vm613, %v540, 0
        %v975 = vsel %vm613, %v541, 0
        %v978 = vsel %vm613, %v542, 0
        %v981 = vsel %vm613, %v543, 0
        %v984 = vsel %vm613, %v544, 0
        %v987 = vsel %vm613, %v545, 0
        %v990 = vsel %vm613, %v546, 0
        %v993 = vsel %vm613, %v547, 0
        %v996 = vsel %vm613, %v548, 0
        %v999 = vsel %vm613, %v549, 0
        %v1002 = vsel %vm613, %v550, 0
        %v1005 = vsel %vm613, %v551, 0
        %v1008 = vsel %vm613, %v552, 0
        %v1011 = vsel %vm613, %v553, 0
        %v1014 = vsel %vm613, %v554, 0
        %v1017 = vsel %vm613, %v555, 0
        %v1020 = vsel %vm613, %v556, 0
        %1022 = vmatpush.xpose.msra.mxu0 %v684
        %1023 = vmatpush.xpose.msra.mxu0 %v681
        %1024 = vmatpush.xpose.msra.mxu0 %v678
        %1025 = vmatpush.xpose.msra.mxu0 %v675
        %1026 = vmatpush.xpose.msra.mxu0 %v672
        %1027 = vmatpush.xpose.msra.mxu0 %v669
        %1028 = vmatpush.xpose.msra.mxu0 %v666
        %1029 = vmatpush.xpose.msra.mxu0 %v663
        %1030 = vmatpush.xpose.msra.mxu0 %v660
        %1031 = vmatpush.xpose.msra.mxu0 %v657
        %1032 = vmatpush.xpose.msra.mxu0 %v654
        %1033 = vmatpush.xpose.msra.mxu0 %v651
        %1034 = vmatpush.xpose.msra.mxu0 %v648
        %1035 = vmatpush.xpose.msra.mxu0 %v645
        %1036 = vmatpush.xpose.msra.mxu0 %v642
        %1037 = vmatpush.xpose.msra.mxu0 %v639
        %1038 = vmatmul.f32.gmra.mxu0 %v615
        %v1039 = vpop.f32.mrf.mxu0
        %v1040 = vadd.f32 %v576, %v1039
        %1041 = vmatmul.f32.gmra.mxu0 %v618
        %v1042 = vpop.f32.mrf.mxu0
        %v1043 = vadd.f32 %v581, %v1042
        %1044 = vmatmul.f32.gmra.mxu0 %v621
        %v1045 = vpop.f32.mrf.mxu0
        %v1046 = vadd.f32 %v586, %v1045
        %1047 = vmatmul.f32.gmra.mxu0 %v624
        %v1048 = vpop.f32.mrf.mxu0
        %v1049 = vadd.f32 %v591, %v1048
        %1050 = vmatmul.f32.gmra.mxu0 %v627
        %v1051 = vpop.f32.mrf.mxu0
        %v1052 = vadd.f32 %v596, %v1051
        %1053 = vmatmul.f32.gmra.mxu0 %v630
        %v1054 = vpop.f32.mrf.mxu0
        %v1055 = vadd.f32 %v601, %v1054
        %1056 = vmatmul.f32.gmra.mxu0 %v633
        %v1057 = vpop.f32.mrf.mxu0
        %v1058 = vadd.f32 %v606, %v1057
        %1059 = vmatmul.f32.gmra.mxu0 %v636
        %v1060 = vpop.f32.mrf.mxu0
        %v1061 = vadd.f32 %v611, %v1060
        %1062 = vdwg.mxu0
        %1063 = vmatpush.xpose.msra.mxu0 %v732
        %1064 = vmatpush.xpose.msra.mxu0 %v729
        %1065 = vmatpush.xpose.msra.mxu0 %v726
        %1066 = vmatpush.xpose.msra.mxu0 %v723
        %1067 = vmatpush.xpose.msra.mxu0 %v720
        %1068 = vmatpush.xpose.msra.mxu0 %v717
        %1069 = vmatpush.xpose.msra.mxu0 %v714
        %1070 = vmatpush.xpose.msra.mxu0 %v711
        %1071 = vmatpush.xpose.msra.mxu0 %v708
        %1072 = vmatpush.xpose.msra.mxu0 %v705
        %1073 = vmatpush.xpose.msra.mxu0 %v702
        %1074 = vmatpush.xpose.msra.mxu0 %v699
        %1075 = vmatpush.xpose.msra.mxu0 %v696
        %1076 = vmatpush.xpose.msra.mxu0 %v693
        %1077 = vmatpush.xpose.msra.mxu0 %v690
        %1078 = vmatpush.xpose.msra.mxu0 %v687
        %1079 = vmatmul.f32.gmra.mxu0 %v615
        %v1080 = vpop.f32.mrf.mxu0
        %v1081 = vadd.f32 %v576, %v1080
        %1082 = vmatmul.f32.gmra.mxu0 %v618
        %v1083 = vpop.f32.mrf.mxu0
        %v1084 = vadd.f32 %v581, %v1083
        %1085 = vmatmul.f32.gmra.mxu0 %v621
        %v1086 = vpop.f32.mrf.mxu0
        %v1087 = vadd.f32 %v586, %v1086
        %1088 = vmatmul.f32.gmra.mxu0 %v624
        %v1089 = vpop.f32.mrf.mxu0
        %v1090 = vadd.f32 %v591, %v1089
        %1091 = vmatmul.f32.gmra.mxu0 %v627
        %v1092 = vpop.f32.mrf.mxu0
        %v1093 = vadd.f32 %v596, %v1092
        %1094 = vmatmul.f32.gmra.mxu0 %v630
        %v1095 = vpop.f32.mrf.mxu0
        %v1096 = vadd.f32 %v601, %v1095
        %1097 = vmatmul.f32.gmra.mxu0 %v633
        %v1098 = vpop.f32.mrf.mxu0
        %v1099 = vadd.f32 %v606, %v1098
        %1100 = vmatmul.f32.gmra.mxu0 %v636
        %v1101 = vpop.f32.mrf.mxu0
        %v1102 = vadd.f32 %v611, %v1101
        %1103 = vdwg.mxu0
        %1104 = vmatpush.xpose.msra.mxu0 %v780
        %1105 = vmatpush.xpose.msra.mxu0 %v777
        %1106 = vmatpush.xpose.msra.mxu0 %v774
        %1107 = vmatpush.xpose.msra.mxu0 %v771
        %1108 = vmatpush.xpose.msra.mxu0 %v768
        %1109 = vmatpush.xpose.msra.mxu0 %v765
        %1110 = vmatpush.xpose.msra.mxu0 %v762
        %1111 = vmatpush.xpose.msra.mxu0 %v759
        %1112 = vmatpush.xpose.msra.mxu0 %v756
        %1113 = vmatpush.xpose.msra.mxu0 %v753
        %1114 = vmatpush.xpose.msra.mxu0 %v750
        %1115 = vmatpush.xpose.msra.mxu0 %v747
        %1116 = vmatpush.xpose.msra.mxu0 %v744
        %1117 = vmatpush.xpose.msra.mxu0 %v741
        %1118 = vmatpush.xpose.msra.mxu0 %v738
        %1119 = vmatpush.xpose.msra.mxu0 %v735
        %1120 = vmatmul.f32.gmra.mxu0 %v615
        %v1121 = vpop.f32.mrf.mxu0
        %v1122 = vadd.f32 %v576, %v1121
        %1123 = vmatmul.f32.gmra.mxu0 %v618
        %v1124 = vpop.f32.mrf.mxu0
        %v1125 = vadd.f32 %v581, %v1124
        %1126 = vmatmul.f32.gmra.mxu0 %v621
        %v1127 = vpop.f32.mrf.mxu0
        %v1128 = vadd.f32 %v586, %v1127
        %1129 = vmatmul.f32.gmra.mxu0 %v624
        %v1130 = vpop.f32.mrf.mxu0
        %v1131 = vadd.f32 %v591, %v1130
        %1132 = vmatmul.f32.gmra.mxu0 %v627
        %v1133 = vpop.f32.mrf.mxu0
        %v1134 = vadd.f32 %v596, %v1133
        %1135 = vmatmul.f32.gmra.mxu0 %v630
        %v1136 = vpop.f32.mrf.mxu0
        %v1137 = vadd.f32 %v601, %v1136
        %1138 = vmatmul.f32.gmra.mxu0 %v633
        %v1139 = vpop.f32.mrf.mxu0
        %v1140 = vadd.f32 %v606, %v1139
        %1141 = vmatmul.f32.gmra.mxu0 %v636
        %v1142 = vpop.f32.mrf.mxu0
        %v1143 = vadd.f32 %v611, %v1142
        %1144 = vdwg.mxu0
        %1145 = vmatpush.xpose.msra.mxu0 %v828
        %1146 = vmatpush.xpose.msra.mxu0 %v825
        %1147 = vmatpush.xpose.msra.mxu0 %v822
        %1148 = vmatpush.xpose.msra.mxu0 %v819
        %1149 = vmatpush.xpose.msra.mxu0 %v816
        %1150 = vmatpush.xpose.msra.mxu0 %v813
        %1151 = vmatpush.xpose.msra.mxu0 %v810
        %1152 = vmatpush.xpose.msra.mxu0 %v807
        %1153 = vmatpush.xpose.msra.mxu0 %v804
        %1154 = vmatpush.xpose.msra.mxu0 %v801
        %1155 = vmatpush.xpose.msra.mxu0 %v798
        %1156 = vmatpush.xpose.msra.mxu0 %v795
        %1157 = vmatpush.xpose.msra.mxu0 %v792
        %1158 = vmatpush.xpose.msra.mxu0 %v789
        %1159 = vmatpush.xpose.msra.mxu0 %v786
        %1160 = vmatpush.xpose.msra.mxu0 %v783
        %1161 = vmatmul.f32.gmra.mxu0 %v615
        %v1162 = vpop.f32.mrf.mxu0
        %v1163 = vadd.f32 %v576, %v1162
        %1164 = vmatmul.f32.gmra.mxu0 %v618
        %v1165 = vpop.f32.mrf.mxu0
        %v1166 = vadd.f32 %v581, %v1165
        %1167 = vmatmul.f32.gmra.mxu0 %v621
        %v1168 = vpop.f32.mrf.mxu0
        %v1169 = vadd.f32 %v586, %v1168
        %1170 = vmatmul.f32.gmra.mxu0 %v624
        %v1171 = vpop.f32.mrf.mxu0
        %v1172 = vadd.f32 %v591, %v1171
        %1173 = vmatmul.f32.gmra.mxu0 %v627
        %v1174 = vpop.f32.mrf.mxu0
        %v1175 = vadd.f32 %v596, %v1174
        %1176 = vmatmul.f32.gmra.mxu0 %v630
        %v1177 = vpop.f32.mrf.mxu0
        %v1178 = vadd.f32 %v601, %v1177
        %1179 = vmatmul.f32.gmra.mxu0 %v633
        %v1180 = vpop.f32.mrf.mxu0
        %v1181 = vadd.f32 %v606, %v1180
        %1182 = vmatmul.f32.gmra.mxu0 %v636
        %v1183 = vpop.f32.mrf.mxu0
        %v1184 = vadd.f32 %v611, %v1183
        %1185 = vdwg.mxu0
        %1186 = vmatpush.xpose.msra.mxu0 %v876
        %1187 = vmatpush.xpose.msra.mxu0 %v873
        %1188 = vmatpush.xpose.msra.mxu0 %v870
        %1189 = vmatpush.xpose.msra.mxu0 %v867
        %1190 = vmatpush.xpose.msra.mxu0 %v864
        %1191 = vmatpush.xpose.msra.mxu0 %v861
        %1192 = vmatpush.xpose.msra.mxu0 %v858
        %1193 = vmatpush.xpose.msra.mxu0 %v855
        %1194 = vmatpush.xpose.msra.mxu0 %v852
        %1195 = vmatpush.xpose.msra.mxu0 %v849
        %1196 = vmatpush.xpose.msra.mxu0 %v846
        %1197 = vmatpush.xpose.msra.mxu0 %v843
        %1198 = vmatpush.xpose.msra.mxu0 %v840
        %1199 = vmatpush.xpose.msra.mxu0 %v837
        %1200 = vmatpush.xpose.msra.mxu0 %v834
        %1201 = vmatpush.xpose.msra.mxu0 %v831
        %1202 = vmatmul.f32.gmra.mxu0 %v615
        %v1203 = vpop.f32.mrf.mxu0
        %v1204 = vadd.f32 %v576, %v1203
        %1205 = vmatmul.f32.gmra.mxu0 %v618
        %v1206 = vpop.f32.mrf.mxu0
        %v1207 = vadd.f32 %v581, %v1206
        %1208 = vmatmul.f32.gmra.mxu0 %v621
        %v1209 = vpop.f32.mrf.mxu0
        %v1210 = vadd.f32 %v586, %v1209
        %1211 = vmatmul.f32.gmra.mxu0 %v624
        %v1212 = vpop.f32.mrf.mxu0
        %v1213 = vadd.f32 %v591, %v1212
        %1214 = vmatmul.f32.gmra.mxu0 %v627
        %v1215 = vpop.f32.mrf.mxu0
        %v1216 = vadd.f32 %v596, %v1215
        %1217 = vmatmul.f32.gmra.mxu0 %v630
        %v1218 = vpop.f32.mrf.mxu0
        %v1219 = vadd.f32 %v601, %v1218
        %1220 = vmatmul.f32.gmra.mxu0 %v633
        %v1221 = vpop.f32.mrf.mxu0
        %v1222 = vadd.f32 %v606, %v1221
        %1223 = vmatmul.f32.gmra.mxu0 %v636
        %v1224 = vpop.f32.mrf.mxu0
        %v1225 = vadd.f32 %v611, %v1224
        %1226 = vdwg.mxu0
        %1227 = vmatpush.xpose.msra.mxu0 %v924
        %1228 = vmatpush.xpose.msra.mxu0 %v921
        %1229 = vmatpush.xpose.msra.mxu0 %v918
        %1230 = vmatpush.xpose.msra.mxu0 %v915
        %1231 = vmatpush.xpose.msra.mxu0 %v912
        %1232 = vmatpush.xpose.msra.mxu0 %v909
        %1233 = vmatpush.xpose.msra.mxu0 %v906
        %1234 = vmatpush.xpose.msra.mxu0 %v903
        %1235 = vmatpush.xpose.msra.mxu0 %v900
        %1236 = vmatpush.xpose.msra.mxu0 %v897
        %1237 = vmatpush.xpose.msra.mxu0 %v894
        %1238 = vmatpush.xpose.msra.mxu0 %v891
        %1239 = vmatpush.xpose.msra.mxu0 %v888
        %1240 = vmatpush.xpose.msra.mxu0 %v885
        %1241 = vmatpush.xpose.msra.mxu0 %v882
        %1242 = vmatpush.xpose.msra.mxu0 %v879
        %1243 = vmatmul.f32.gmra.mxu0 %v615
        %v1244 = vpop.f32.mrf.mxu0
        %v1245 = vadd.f32 %v576, %v1244
        %1246 = vmatmul.f32.gmra.mxu0 %v618
        %v1247 = vpop.f32.mrf.mxu0
        %v1248 = vadd.f32 %v581, %v1247
        %1249 = vmatmul.f32.gmra.mxu0 %v621
        %v1250 = vpop.f32.mrf.mxu0
        %v1251 = vadd.f32 %v586, %v1250
        %1252 = vmatmul.f32.gmra.mxu0 %v624
        %v1253 = vpop.f32.mrf.mxu0
        %v1254 = vadd.f32 %v591, %v1253
        %1255 = vmatmul.f32.gmra.mxu0 %v627
        %v1256 = vpop.f32.mrf.mxu0
        %v1257 = vadd.f32 %v596, %v1256
        %1258 = vmatmul.f32.gmra.mxu0 %v630
        %v1259 = vpop.f32.mrf.mxu0
        %v1260 = vadd.f32 %v601, %v1259
        %1261 = vmatmul.f32.gmra.mxu0 %v633
        %v1262 = vpop.f32.mrf.mxu0
        %v1263 = vadd.f32 %v606, %v1262
        %1264 = vmatmul.f32.gmra.mxu0 %v636
        %v1265 = vpop.f32.mrf.mxu0
        %v1266 = vadd.f32 %v611, %v1265
        %1267 = vdwg.mxu0
        %1268 = vmatpush.xpose.msra.mxu0 %v972
        %1269 = vmatpush.xpose.msra.mxu0 %v969
        %1270 = vmatpush.xpose.msra.mxu0 %v966
        %1271 = vmatpush.xpose.msra.mxu0 %v963
        %1272 = vmatpush.xpose.msra.mxu0 %v960
        %1273 = vmatpush.xpose.msra.mxu0 %v957
        %1274 = vmatpush.xpose.msra.mxu0 %v954
        %1275 = vmatpush.xpose.msra.mxu0 %v951
        %1276 = vmatpush.xpose.msra.mxu0 %v948
        %1277 = vmatpush.xpose.msra.mxu0 %v945
        %1278 = vmatpush.xpose.msra.mxu0 %v942
        %1279 = vmatpush.xpose.msra.mxu0 %v939
        %1280 = vmatpush.xpose.msra.mxu0 %v936
        %1281 = vmatpush.xpose.msra.mxu0 %v933
        %1282 = vmatpush.xpose.msra.mxu0 %v930
        %1283 = vmatpush.xpose.msra.mxu0 %v927
        %1284 = vmatmul.f32.gmra.mxu0 %v615
        %v1285 = vpop.f32.mrf.mxu0
        %v1286 = vadd.f32 %v576, %v1285
        %1287 = vmatmul.f32.gmra.mxu0 %v618
        %v1288 = vpop.f32.mrf.mxu0
        %v1289 = vadd.f32 %v581, %v1288
        %1290 = vmatmul.f32.gmra.mxu0 %v621
        %v1291 = vpop.f32.mrf.mxu0
        %v1292 = vadd.f32 %v586, %v1291
        %1293 = vmatmul.f32.gmra.mxu0 %v624
        %v1294 = vpop.f32.mrf.mxu0
        %v1295 = vadd.f32 %v591, %v1294
        %1296 = vmatmul.f32.gmra.mxu0 %v627
        %v1297 = vpop.f32.mrf.mxu0
        %v1298 = vadd.f32 %v596, %v1297
        %1299 = vmatmul.f32.gmra.mxu0 %v630
        %v1300 = vpop.f32.mrf.mxu0
        %v1301 = vadd.f32 %v601, %v1300
        %1302 = vmatmul.f32.gmra.mxu0 %v633
        %v1303 = vpop.f32.mrf.mxu0
        %v1304 = vadd.f32 %v606, %v1303
        %1305 = vmatmul.f32.gmra.mxu0 %v636
        %v1306 = vpop.f32.mrf.mxu0
        %v1307 = vadd.f32 %v611, %v1306
        %1308 = vdwg.mxu0
        %1309 = vmatpush.xpose.msra.mxu0 %v1020
        %1310 = vmatpush.xpose.msra.mxu0 %v1017
        %1311 = vmatpush.xpose.msra.mxu0 %v1014
        %1312 = vmatpush.xpose.msra.mxu0 %v1011
        %1313 = vmatpush.xpose.msra.mxu0 %v1008
        %1314 = vmatpush.xpose.msra.mxu0 %v1005
        %1315 = vmatpush.xpose.msra.mxu0 %v1002
        %1316 = vmatpush.xpose.msra.mxu0 %v999
        %1317 = vmatpush.xpose.msra.mxu0 %v996
        %1318 = vmatpush.xpose.msra.mxu0 %v993
        %1319 = vmatpush.xpose.msra.mxu0 %v990
        %1320 = vmatpush.xpose.msra.mxu0 %v987
        %1321 = vmatpush.xpose.msra.mxu0 %v984
        %1322 = vmatpush.xpose.msra.mxu0 %v981
        %1323 = vmatpush.xpose.msra.mxu0 %v978
        %1324 = vmatpush.xpose.msra.mxu0 %v975
        %1325 = vmatmul.f32.gmra.mxu0 %v615
        %v1326 = vpop.f32.mrf.mxu0
        %v1327 = vadd.f32 %v576, %v1326
        %1328 = vmatmul.f32.gmra.mxu0 %v618
        %v1329 = vpop.f32.mrf.mxu0
        %v1330 = vadd.f32 %v581, %v1329
        %1331 = vmatmul.f32.gmra.mxu0 %v621
        %v1332 = vpop.f32.mrf.mxu0
        %v1333 = vadd.f32 %v586, %v1332
        %1334 = vmatmul.f32.gmra.mxu0 %v624
        %v1335 = vpop.f32.mrf.mxu0
        %v1336 = vadd.f32 %v591, %v1335
        %1337 = vmatmul.f32.gmra.mxu0 %v627
        %v1338 = vpop.f32.mrf.mxu0
        %v1339 = vadd.f32 %v596, %v1338
        %1340 = vmatmul.f32.gmra.mxu0 %v630
        %v1341 = vpop.f32.mrf.mxu0
        %v1342 = vadd.f32 %v601, %v1341
        %1343 = vmatmul.f32.gmra.mxu0 %v633
        %v1344 = vpop.f32.mrf.mxu0
        %v1345 = vadd.f32 %v606, %v1344
        %1346 = vmatmul.f32.gmra.mxu0 %v636
        %v1347 = vpop.f32.mrf.mxu0
        %v1348 = vadd.f32 %v611, %v1347
        %1349 = vdwg.mxu0
        %v1350 = vsub.f32 0.0, %v1040
        %v1351 = vsub.f32 0.0, %v1081
        %v1352 = vsub.f32 0.0, %v1122
        %v1353 = vsub.f32 0.0, %v1163
        %v1354 = vsub.f32 0.0, %v1204
        %v1355 = vsub.f32 0.0, %v1245
        %v1356 = vsub.f32 0.0, %v1286
        %v1357 = vsub.f32 0.0, %v1327
        %v1358 = vsub.f32 0.0, %v1043
        %v1359 = vsub.f32 0.0, %v1084
        %v1360 = vsub.f32 0.0, %v1125
        %v1361 = vsub.f32 0.0, %v1166
        %v1362 = vsub.f32 0.0, %v1207
        %v1363 = vsub.f32 0.0, %v1248
        %v1364 = vsub.f32 0.0, %v1289
        %v1365 = vsub.f32 0.0, %v1330
        %v1366 = vsub.f32 0.0, %v1046
        %v1367 = vsub.f32 0.0, %v1087
        %v1368 = vsub.f32 0.0, %v1128
        %v1369 = vsub.f32 0.0, %v1169
        %v1370 = vsub.f32 0.0, %v1210
        %v1371 = vsub.f32 0.0, %v1251
        %v1372 = vsub.f32 0.0, %v1292
        %v1373 = vsub.f32 0.0, %v1333
        %v1374 = vsub.f32 0.0, %v1049
        %v1375 = vsub.f32 0.0, %v1090
        %v1376 = vsub.f32 0.0, %v1131
        %v1377 = vsub.f32 0.0, %v1172
        %v1378 = vsub.f32 0.0, %v1213
        %v1379 = vsub.f32 0.0, %v1254
        %v1380 = vsub.f32 0.0, %v1295
        %v1381 = vsub.f32 0.0, %v1336
        %v1382 = vsub.f32 0.0, %v1052
        %v1383 = vsub.f32 0.0, %v1093
        %v1384 = vsub.f32 0.0, %v1134
        %v1385 = vsub.f32 0.0, %v1175
        %v1386 = vsub.f32 0.0, %v1216
        %v1387 = vsub.f32 0.0, %v1257
        %v1388 = vsub.f32 0.0, %v1298
        %v1389 = vsub.f32 0.0, %v1339
        %v1390 = vsub.f32 0.0, %v1055
        %v1391 = vsub.f32 0.0, %v1096
        %v1392 = vsub.f32 0.0, %v1137
        %v1393 = vsub.f32 0.0, %v1178
        %v1394 = vsub.f32 0.0, %v1219
        %v1395 = vsub.f32 0.0, %v1260
        %v1396 = vsub.f32 0.0, %v1301
        %v1397 = vsub.f32 0.0, %v1342
        %v1398 = vsub.f32 0.0, %v1058
        %v1399 = vsub.f32 0.0, %v1099
        %v1400 = vsub.f32 0.0, %v1140
        %v1401 = vsub.f32 0.0, %v1181
        %v1402 = vsub.f32 0.0, %v1222
        %v1403 = vsub.f32 0.0, %v1263
        %v1404 = vsub.f32 0.0, %v1304
        %v1405 = vsub.f32 0.0, %v1345
        %v1406 = vsub.f32 0.0, %v1061
        %v1407 = vsub.f32 0.0, %v1102
        %v1408 = vsub.f32 0.0, %v1143
        %v1409 = vsub.f32 0.0, %v1184
        %v1410 = vsub.f32 0.0, %v1225
        %v1411 = vsub.f32 0.0, %v1266
        %v1412 = vsub.f32 0.0, %v1307
        %v1413 = vsub.f32 0.0, %v1348
        %v1414 = vmul.f32 %v1350, 1.442695
        %v1415 = vpow.pop %v1414
        %v1416 = vmul.f32 %v1351, 1.442695
        %v1417 = vpow.pop %v1416
        %v1418 = vmul.f32 %v1352, 1.442695
        %v1419 = vpow.pop %v1418
        %v1420 = vmul.f32 %v1353, 1.442695
        %v1421 = vpow.pop %v1420
        %v1422 = vmul.f32 %v1354, 1.442695
        %v1423 = vpow.pop %v1422
        %v1424 = vmul.f32 %v1355, 1.442695
        %v1425 = vpow.pop %v1424
        %v1426 = vmul.f32 %v1356, 1.442695
        %v1427 = vpow.pop %v1426
        %v1428 = vmul.f32 %v1357, 1.442695
        %v1429 = vpow.pop %v1428
        %v1430 = vmul.f32 %v1358, 1.442695
        %v1431 = vpow.pop %v1430
        %v1432 = vmul.f32 %v1359, 1.442695
        %v1433 = vpow.pop %v1432
        %v1434 = vmul.f32 %v1360, 1.442695
        %v1435 = vpow.pop %v1434
        %v1436 = vmul.f32 %v1361, 1.442695
        %v1437 = vpow.pop %v1436
        %v1438 = vmul.f32 %v1362, 1.442695
        %v1439 = vpow.pop %v1438
        %v1440 = vmul.f32 %v1363, 1.442695
        %v1441 = vpow.pop %v1440
        %v1442 = vmul.f32 %v1364, 1.442695
        %v1443 = vpow.pop %v1442
        %v1444 = vmul.f32 %v1365, 1.442695
        %v1445 = vpow.pop %v1444
        %v1446 = vmul.f32 %v1366, 1.442695
        %v1447 = vpow.pop %v1446
        %v1448 = vmul.f32 %v1367, 1.442695
        %v1449 = vpow.pop %v1448
        %v1450 = vmul.f32 %v1368, 1.442695
        %v1451 = vpow.pop %v1450
        %v1452 = vmul.f32 %v1369, 1.442695
        %v1453 = vpow.pop %v1452
        %v1454 = vmul.f32 %v1370, 1.442695
        %v1455 = vpow.pop %v1454
        %v1456 = vmul.f32 %v1371, 1.442695
        %v1457 = vpow.pop %v1456
        %v1458 = vmul.f32 %v1372, 1.442695
        %v1459 = vpow.pop %v1458
        %v1460 = vmul.f32 %v1373, 1.442695
        %v1461 = vpow.pop %v1460
        %v1462 = vmul.f32 %v1374, 1.442695
        %v1463 = vpow.pop %v1462
        %v1464 = vmul.f32 %v1375, 1.442695
        %v1465 = vpow.pop %v1464
        %v1466 = vmul.f32 %v1376, 1.442695
        %v1467 = vpow.pop %v1466
        %v1468 = vmul.f32 %v1377, 1.442695
        %v1469 = vpow.pop %v1468
        %v1470 = vmul.f32 %v1378, 1.442695
        %v1471 = vpow.pop %v1470
        %v1472 = vmul.f32 %v1379, 1.442695
        %v1473 = vpow.pop %v1472
        %v1474 = vmul.f32 %v1380, 1.442695
        %v1475 = vpow.pop %v1474
        %v1476 = vmul.f32 %v1381, 1.442695
        %v1477 = vpow.pop %v1476
        %v1478 = vmul.f32 %v1382, 1.442695
        %v1479 = vpow.pop %v1478
        %v1480 = vmul.f32 %v1383, 1.442695
        %v1481 = vpow.pop %v1480
        %v1482 = vmul.f32 %v1384, 1.442695
        %v1483 = vpow.pop %v1482
        %v1484 = vmul.f32 %v1385, 1.442695
        %v1485 = vpow.pop %v1484
        %v1486 = vmul.f32 %v1386, 1.442695
        %v1487 = vpow.pop %v1486
        %v1488 = vmul.f32 %v1387, 1.442695
        %v1489 = vpow.pop %v1488
        %v1490 = vmul.f32 %v1388, 1.442695
        %v1491 = vpow.pop %v1490
        %v1492 = vmul.f32 %v1389, 1.442695
        %v1493 = vpow.pop %v1492
        %v1494 = vmul.f32 %v1390, 1.442695
        %v1495 = vpow.pop %v1494
        %v1496 = vmul.f32 %v1391, 1.442695
        %v1497 = vpow.pop %v1496
        %v1498 = vmul.f32 %v1392, 1.442695
        %v1499 = vpow.pop %v1498
        %v1500 = vmul.f32 %v1393, 1.442695
        %v1501 = vpow.pop %v1500
        %v1502 = vmul.f32 %v1394, 1.442695
        %v1503 = vpow.pop %v1502
        %v1504 = vmul.f32 %v1395, 1.442695
        %v1505 = vpow.pop %v1504
        %v1506 = vmul.f32 %v1396, 1.442695
        %v1507 = vpow.pop %v1506
        %v1508 = vmul.f32 %v1397, 1.442695
        %v1509 = vpow.pop %v1508
        %v1510 = vmul.f32 %v1398, 1.442695
        %v1511 = vpow.pop %v1510
        %v1512 = vmul.f32 %v1399, 1.442695
        %v1513 = vpow.pop %v1512
        %v1514 = vmul.f32 %v1400, 1.442695
        %v1515 = vpow.pop %v1514
        %v1516 = vmul.f32 %v1401, 1.442695
        %v1517 = vpow.pop %v1516
        %v1518 = vmul.f32 %v1402, 1.442695
        %v1519 = vpow.pop %v1518
        %v1520 = vmul.f32 %v1403, 1.442695
        %v1521 = vpow.pop %v1520
        %v1522 = vmul.f32 %v1404, 1.442695
        %v1523 = vpow.pop %v1522
        %v1524 = vmul.f32 %v1405, 1.442695
        %v1525 = vpow.pop %v1524
        %v1526 = vmul.f32 %v1406, 1.442695
        %v1527 = vpow.pop %v1526
        %v1528 = vmul.f32 %v1407, 1.442695
        %v1529 = vpow.pop %v1528
        %v1530 = vmul.f32 %v1408, 1.442695
        %v1531 = vpow.pop %v1530
        %v1532 = vmul.f32 %v1409, 1.442695
        %v1533 = vpow.pop %v1532
        %v1534 = vmul.f32 %v1410, 1.442695
        %v1535 = vpow.pop %v1534
        %v1536 = vmul.f32 %v1411, 1.442695
        %v1537 = vpow.pop %v1536
        %v1538 = vmul.f32 %v1412, 1.442695
        %v1539 = vpow.pop %v1538
        %v1540 = vmul.f32 %v1413, 1.442695
        %v1541 = vpow.pop %v1540
        %v1542 = vadd.f32 %v1415, 1.0
        %v1543 = vadd.f32 %v1417, 1.0
        %v1544 = vadd.f32 %v1419, 1.0
        %v1545 = vadd.f32 %v1421, 1.0
        %v1546 = vadd.f32 %v1423, 1.0
        %v1547 = vadd.f32 %v1425, 1.0
        %v1548 = vadd.f32 %v1427, 1.0
        %v1549 = vadd.f32 %v1429, 1.0
        %v1550 = vadd.f32 %v1431, 1.0
        %v1551 = vadd.f32 %v1433, 1.0
        %v1552 = vadd.f32 %v1435, 1.0
        %v1553 = vadd.f32 %v1437, 1.0
        %v1554 = vadd.f32 %v1439, 1.0
        %v1555 = vadd.f32 %v1441, 1.0
        %v1556 = vadd.f32 %v1443, 1.0
        %v1557 = vadd.f32 %v1445, 1.0
        %v1558 = vadd.f32 %v1447, 1.0
        %v1559 = vadd.f32 %v1449, 1.0
        %v1560 = vadd.f32 %v1451, 1.0
        %v1561 = vadd.f32 %v1453, 1.0
        %v1562 = vadd.f32 %v1455, 1.0
        %v1563 = vadd.f32 %v1457, 1.0
        %v1564 = vadd.f32 %v1459, 1.0
        %v1565 = vadd.f32 %v1461, 1.0
        %v1566 = vadd.f32 %v1463, 1.0
        %v1567 = vadd.f32 %v1465, 1.0
        %v1568 = vadd.f32 %v1467, 1.0
        %v1569 = vadd.f32 %v1469, 1.0
        %v1570 = vadd.f32 %v1471, 1.0
        %v1571 = vadd.f32 %v1473, 1.0
        %v1572 = vadd.f32 %v1475, 1.0
        %v1573 = vadd.f32 %v1477, 1.0
        %v1574 = vadd.f32 %v1479, 1.0
        %v1575 = vadd.f32 %v1481, 1.0
        %v1576 = vadd.f32 %v1483, 1.0
        %v1577 = vadd.f32 %v1485, 1.0
        %v1578 = vadd.f32 %v1487, 1.0
        %v1579 = vadd.f32 %v1489, 1.0
        %v1580 = vadd.f32 %v1491, 1.0
        %v1581 = vadd.f32 %v1493, 1.0
        %v1582 = vadd.f32 %v1495, 1.0
        %v1583 = vadd.f32 %v1497, 1.0
        %v1584 = vadd.f32 %v1499, 1.0
        %v1585 = vadd.f32 %v1501, 1.0
        %v1586 = vadd.f32 %v1503, 1.0
        %v1587 = vadd.f32 %v1505, 1.0
        %v1588 = vadd.f32 %v1507, 1.0
        %v1589 = vadd.f32 %v1509, 1.0
        %v1590 = vadd.f32 %v1511, 1.0
        %v1591 = vadd.f32 %v1513, 1.0
        %v1592 = vadd.f32 %v1515, 1.0
        %v1593 = vadd.f32 %v1517, 1.0
        %v1594 = vadd.f32 %v1519, 1.0
        %v1595 = vadd.f32 %v1521, 1.0
        %v1596 = vadd.f32 %v1523, 1.0
        %v1597 = vadd.f32 %v1525, 1.0
        %v1598 = vadd.f32 %v1527, 1.0
        %v1599 = vadd.f32 %v1529, 1.0
        %v1600 = vadd.f32 %v1531, 1.0
        %v1601 = vadd.f32 %v1533, 1.0
        %v1602 = vadd.f32 %v1535, 1.0
        %v1603 = vadd.f32 %v1537, 1.0
        %v1604 = vadd.f32 %v1539, 1.0
        %v1605 = vadd.f32 %v1541, 1.0
        %v1606 = vrcp.pop %v1542
        %v1607 = vmul.f32 %v1542, %v1606
        %v1608 = vsub.f32 1.0, %v1607
        %v1609 = vmul.f32 %v1606, %v1608
        %v1610 = vadd.f32 %v1606, %v1609
        %vm1611 = vweird.f32 %v1542
        %vm1612 = vweird.f32 %v1606
        %vm1613 = vmor %vm1611, %vm1612
        %v1614 = vsel %vm1613, %v1606, %v1610
        %v1615 = vand.u32 2147483647, %v1542
        %vm1616 = vcmp.eq.f32.partialorder %v1615, 8.507059e+37
        %v1617 = vand.u32 %v1542, 2147483648
        %v1618 = vor.u32 1.1754944e-38, %v1617
        %v1619 = vsel %vm1616, %v1618, %v1614
        %v1620 = vmul.f32 1.0, %v1619
        %v1621 = vrcp.pop %v1543
        %v1622 = vmul.f32 %v1543, %v1621
        %v1623 = vsub.f32 1.0, %v1622
        %v1624 = vmul.f32 %v1621, %v1623
        %v1625 = vadd.f32 %v1621, %v1624
        %vm1626 = vweird.f32 %v1543
        %vm1627 = vweird.f32 %v1621
        %vm1628 = vmor %vm1626, %vm1627
        %v1629 = vsel %vm1628, %v1621, %v1625
        %v1630 = vand.u32 2147483647, %v1543
        %vm1631 = vcmp.eq.f32.partialorder %v1630, 8.507059e+37
        %v1632 = vand.u32 %v1543, 2147483648
        %v1633 = vor.u32 1.1754944e-38, %v1632
        %v1634 = vsel %vm1631, %v1633, %v1629
        %v1635 = vmul.f32 1.0, %v1634
        %v1636 = vrcp.pop %v1544
        %v1637 = vmul.f32 %v1544, %v1636
        %v1638 = vsub.f32 1.0, %v1637
        %v1639 = vmul.f32 %v1636, %v1638
        %v1640 = vadd.f32 %v1636, %v1639
        %vm1641 = vweird.f32 %v1544
        %vm1642 = vweird.f32 %v1636
        %vm1643 = vmor %vm1641, %vm1642
        %v1644 = vsel %vm1643, %v1636, %v1640
        %v1645 = vand.u32 2147483647, %v1544
        %vm1646 = vcmp.eq.f32.partialorder %v1645, 8.507059e+37
        %v1647 = vand.u32 %v1544, 2147483648
        %v1648 = vor.u32 1.1754944e-38, %v1647
        %v1649 = vsel %vm1646, %v1648, %v1644
        %v1650 = vmul.f32 1.0, %v1649
        %v1651 = vrcp.pop %v1545
        %v1652 = vmul.f32 %v1545, %v1651
        %v1653 = vsub.f32 1.0, %v1652
        %v1654 = vmul.f32 %v1651, %v1653
        %v1655 = vadd.f32 %v1651, %v1654
        %vm1656 = vweird.f32 %v1545
        %vm1657 = vweird.f32 %v1651
        %vm1658 = vmor %vm1656, %vm1657
        %v1659 = vsel %vm1658, %v1651, %v1655
        %v1660 = vand.u32 2147483647, %v1545
        %vm1661 = vcmp.eq.f32.partialorder %v1660, 8.507059e+37
        %v1662 = vand.u32 %v1545, 2147483648
        %v1663 = vor.u32 1.1754944e-38, %v1662
        %v1664 = vsel %vm1661, %v1663, %v1659
        %v1665 = vmul.f32 1.0, %v1664
        %v1666 = vrcp.pop %v1546
        %v1667 = vmul.f32 %v1546, %v1666
        %v1668 = vsub.f32 1.0, %v1667
        %v1669 = vmul.f32 %v1666, %v1668
        %v1670 = vadd.f32 %v1666, %v1669
        %vm1671 = vweird.f32 %v1546
        %vm1672 = vweird.f32 %v1666
        %vm1673 = vmor %vm1671, %vm1672
        %v1674 = vsel %vm1673, %v1666, %v1670
        %v1675 = vand.u32 2147483647, %v1546
        %vm1676 = vcmp.eq.f32.partialorder %v1675, 8.507059e+37
        %v1677 = vand.u32 %v1546, 2147483648
        %v1678 = vor.u32 1.1754944e-38, %v1677
        %v1679 = vsel %vm1676, %v1678, %v1674
        %v1680 = vmul.f32 1.0, %v1679
        %v1681 = vrcp.pop %v1547
        %v1682 = vmul.f32 %v1547, %v1681
        %v1683 = vsub.f32 1.0, %v1682
        %v1684 = vmul.f32 %v1681, %v1683
        %v1685 = vadd.f32 %v1681, %v1684
        %vm1686 = vweird.f32 %v1547
        %vm1687 = vweird.f32 %v1681
        %vm1688 = vmor %vm1686, %vm1687
        %v1689 = vsel %vm1688, %v1681, %v1685
        %v1690 = vand.u32 2147483647, %v1547
        %vm1691 = vcmp.eq.f32.partialorder %v1690, 8.507059e+37
        %v1692 = vand.u32 %v1547, 2147483648
        %v1693 = vor.u32 1.1754944e-38, %v1692
        %v1694 = vsel %vm1691, %v1693, %v1689
        %v1695 = vmul.f32 1.0, %v1694
        %v1696 = vrcp.pop %v1548
        %v1697 = vmul.f32 %v1548, %v1696
        %v1698 = vsub.f32 1.0, %v1697
        %v1699 = vmul.f32 %v1696, %v1698
        %v1700 = vadd.f32 %v1696, %v1699
        %vm1701 = vweird.f32 %v1548
        %vm1702 = vweird.f32 %v1696
        %vm1703 = vmor %vm1701, %vm1702
        %v1704 = vsel %vm1703, %v1696, %v1700
        %v1705 = vand.u32 2147483647, %v1548
        %vm1706 = vcmp.eq.f32.partialorder %v1705, 8.507059e+37
        %v1707 = vand.u32 %v1548, 2147483648
        %v1708 = vor.u32 1.1754944e-38, %v1707
        %v1709 = vsel %vm1706, %v1708, %v1704
        %v1710 = vmul.f32 1.0, %v1709
        %v1711 = vrcp.pop %v1549
        %v1712 = vmul.f32 %v1549, %v1711
        %v1713 = vsub.f32 1.0, %v1712
        %v1714 = vmul.f32 %v1711, %v1713
        %v1715 = vadd.f32 %v1711, %v1714
        %vm1716 = vweird.f32 %v1549
        %vm1717 = vweird.f32 %v1711
        %vm1718 = vmor %vm1716, %vm1717
        %v1719 = vsel %vm1718, %v1711, %v1715
        %v1720 = vand.u32 2147483647, %v1549
        %vm1721 = vcmp.eq.f32.partialorder %v1720, 8.507059e+37
        %v1722 = vand.u32 %v1549, 2147483648
        %v1723 = vor.u32 1.1754944e-38, %v1722
        %v1724 = vsel %vm1721, %v1723, %v1719
        %v1725 = vmul.f32 1.0, %v1724
        %v1726 = vrcp.pop %v1550
        %v1727 = vmul.f32 %v1550, %v1726
        %v1728 = vsub.f32 1.0, %v1727
        %v1729 = vmul.f32 %v1726, %v1728
        %v1730 = vadd.f32 %v1726, %v1729
        %vm1731 = vweird.f32 %v1550
        %vm1732 = vweird.f32 %v1726
        %vm1733 = vmor %vm1731, %vm1732
        %v1734 = vsel %vm1733, %v1726, %v1730
        %v1735 = vand.u32 2147483647, %v1550
        %vm1736 = vcmp.eq.f32.partialorder %v1735, 8.507059e+37
        %v1737 = vand.u32 %v1550, 2147483648
        %v1738 = vor.u32 1.1754944e-38, %v1737
        %v1739 = vsel %vm1736, %v1738, %v1734
        %v1740 = vmul.f32 1.0, %v1739
        %v1741 = vrcp.pop %v1551
        %v1742 = vmul.f32 %v1551, %v1741
        %v1743 = vsub.f32 1.0, %v1742
        %v1744 = vmul.f32 %v1741, %v1743
        %v1745 = vadd.f32 %v1741, %v1744
        %vm1746 = vweird.f32 %v1551
        %vm1747 = vweird.f32 %v1741
        %vm1748 = vmor %vm1746, %vm1747
        %v1749 = vsel %vm1748, %v1741, %v1745
        %v1750 = vand.u32 2147483647, %v1551
        %vm1751 = vcmp.eq.f32.partialorder %v1750, 8.507059e+37
        %v1752 = vand.u32 %v1551, 2147483648
        %v1753 = vor.u32 1.1754944e-38, %v1752
        %v1754 = vsel %vm1751, %v1753, %v1749
        %v1755 = vmul.f32 1.0, %v1754
        %v1756 = vrcp.pop %v1552
        %v1757 = vmul.f32 %v1552, %v1756
        %v1758 = vsub.f32 1.0, %v1757
        %v1759 = vmul.f32 %v1756, %v1758
        %v1760 = vadd.f32 %v1756, %v1759
        %vm1761 = vweird.f32 %v1552
        %vm1762 = vweird.f32 %v1756
        %vm1763 = vmor %vm1761, %vm1762
        %v1764 = vsel %vm1763, %v1756, %v1760
        %v1765 = vand.u32 2147483647, %v1552
        %vm1766 = vcmp.eq.f32.partialorder %v1765, 8.507059e+37
        %v1767 = vand.u32 %v1552, 2147483648
        %v1768 = vor.u32 1.1754944e-38, %v1767
        %v1769 = vsel %vm1766, %v1768, %v1764
        %v1770 = vmul.f32 1.0, %v1769
        %v1771 = vrcp.pop %v1553
        %v1772 = vmul.f32 %v1553, %v1771
        %v1773 = vsub.f32 1.0, %v1772
        %v1774 = vmul.f32 %v1771, %v1773
        %v1775 = vadd.f32 %v1771, %v1774
        %vm1776 = vweird.f32 %v1553
        %vm1777 = vweird.f32 %v1771
        %vm1778 = vmor %vm1776, %vm1777
        %v1779 = vsel %vm1778, %v1771, %v1775
        %v1780 = vand.u32 2147483647, %v1553
        %vm1781 = vcmp.eq.f32.partialorder %v1780, 8.507059e+37
        %v1782 = vand.u32 %v1553, 2147483648
        %v1783 = vor.u32 1.1754944e-38, %v1782
        %v1784 = vsel %vm1781, %v1783, %v1779
        %v1785 = vmul.f32 1.0, %v1784
        %v1786 = vrcp.pop %v1554
        %v1787 = vmul.f32 %v1554, %v1786
        %v1788 = vsub.f32 1.0, %v1787
        %v1789 = vmul.f32 %v1786, %v1788
        %v1790 = vadd.f32 %v1786, %v1789
        %vm1791 = vweird.f32 %v1554
        %vm1792 = vweird.f32 %v1786
        %vm1793 = vmor %vm1791, %vm1792
        %v1794 = vsel %vm1793, %v1786, %v1790
        %v1795 = vand.u32 2147483647, %v1554
        %vm1796 = vcmp.eq.f32.partialorder %v1795, 8.507059e+37
        %v1797 = vand.u32 %v1554, 2147483648
        %v1798 = vor.u32 1.1754944e-38, %v1797
        %v1799 = vsel %vm1796, %v1798, %v1794
        %v1800 = vmul.f32 1.0, %v1799
        %v1801 = vrcp.pop %v1555
        %v1802 = vmul.f32 %v1555, %v1801
        %v1803 = vsub.f32 1.0, %v1802
        %v1804 = vmul.f32 %v1801, %v1803
        %v1805 = vadd.f32 %v1801, %v1804
        %vm1806 = vweird.f32 %v1555
        %vm1807 = vweird.f32 %v1801
        %vm1808 = vmor %vm1806, %vm1807
        %v1809 = vsel %vm1808, %v1801, %v1805
        %v1810 = vand.u32 2147483647, %v1555
        %vm1811 = vcmp.eq.f32.partialorder %v1810, 8.507059e+37
        %v1812 = vand.u32 %v1555, 2147483648
        %v1813 = vor.u32 1.1754944e-38, %v1812
        %v1814 = vsel %vm1811, %v1813, %v1809
        %v1815 = vmul.f32 1.0, %v1814
        %v1816 = vrcp.pop %v1556
        %v1817 = vmul.f32 %v1556, %v1816
        %v1818 = vsub.f32 1.0, %v1817
        %v1819 = vmul.f32 %v1816, %v1818
        %v1820 = vadd.f32 %v1816, %v1819
        %vm1821 = vweird.f32 %v1556
        %vm1822 = vweird.f32 %v1816
        %vm1823 = vmor %vm1821, %vm1822
        %v1824 = vsel %vm1823, %v1816, %v1820
        %v1825 = vand.u32 2147483647, %v1556
        %vm1826 = vcmp.eq.f32.partialorder %v1825, 8.507059e+37
        %v1827 = vand.u32 %v1556, 2147483648
        %v1828 = vor.u32 1.1754944e-38, %v1827
        %v1829 = vsel %vm1826, %v1828, %v1824
        %v1830 = vmul.f32 1.0, %v1829
        %v1831 = vrcp.pop %v1557
        %v1832 = vmul.f32 %v1557, %v1831
        %v1833 = vsub.f32 1.0, %v1832
        %v1834 = vmul.f32 %v1831, %v1833
        %v1835 = vadd.f32 %v1831, %v1834
        %vm1836 = vweird.f32 %v1557
        %vm1837 = vweird.f32 %v1831
        %vm1838 = vmor %vm1836, %vm1837
        %v1839 = vsel %vm1838, %v1831, %v1835
        %v1840 = vand.u32 2147483647, %v1557
        %vm1841 = vcmp.eq.f32.partialorder %v1840, 8.507059e+37
        %v1842 = vand.u32 %v1557, 2147483648
        %v1843 = vor.u32 1.1754944e-38, %v1842
        %v1844 = vsel %vm1841, %v1843, %v1839
        %v1845 = vmul.f32 1.0, %v1844
        %v1846 = vrcp.pop %v1558
        %v1847 = vmul.f32 %v1558, %v1846
        %v1848 = vsub.f32 1.0, %v1847
        %v1849 = vmul.f32 %v1846, %v1848
        %v1850 = vadd.f32 %v1846, %v1849
        %vm1851 = vweird.f32 %v1558
        %vm1852 = vweird.f32 %v1846
        %vm1853 = vmor %vm1851, %vm1852
        %v1854 = vsel %vm1853, %v1846, %v1850
        %v1855 = vand.u32 2147483647, %v1558
        %vm1856 = vcmp.eq.f32.partialorder %v1855, 8.507059e+37
        %v1857 = vand.u32 %v1558, 2147483648
        %v1858 = vor.u32 1.1754944e-38, %v1857
        %v1859 = vsel %vm1856, %v1858, %v1854
        %v1860 = vmul.f32 1.0, %v1859
        %v1861 = vrcp.pop %v1559
        %v1862 = vmul.f32 %v1559, %v1861
        %v1863 = vsub.f32 1.0, %v1862
        %v1864 = vmul.f32 %v1861, %v1863
        %v1865 = vadd.f32 %v1861, %v1864
        %vm1866 = vweird.f32 %v1559
        %vm1867 = vweird.f32 %v1861
        %vm1868 = vmor %vm1866, %vm1867
        %v1869 = vsel %vm1868, %v1861, %v1865
        %v1870 = vand.u32 2147483647, %v1559
        %vm1871 = vcmp.eq.f32.partialorder %v1870, 8.507059e+37
        %v1872 = vand.u32 %v1559, 2147483648
        %v1873 = vor.u32 1.1754944e-38, %v1872
        %v1874 = vsel %vm1871, %v1873, %v1869
        %v1875 = vmul.f32 1.0, %v1874
        %v1876 = vrcp.pop %v1560
        %v1877 = vmul.f32 %v1560, %v1876
        %v1878 = vsub.f32 1.0, %v1877
        %v1879 = vmul.f32 %v1876, %v1878
        %v1880 = vadd.f32 %v1876, %v1879
        %vm1881 = vweird.f32 %v1560
        %vm1882 = vweird.f32 %v1876
        %vm1883 = vmor %vm1881, %vm1882
        %v1884 = vsel %vm1883, %v1876, %v1880
        %v1885 = vand.u32 2147483647, %v1560
        %vm1886 = vcmp.eq.f32.partialorder %v1885, 8.507059e+37
        %v1887 = vand.u32 %v1560, 2147483648
        %v1888 = vor.u32 1.1754944e-38, %v1887
        %v1889 = vsel %vm1886, %v1888, %v1884
        %v1890 = vmul.f32 1.0, %v1889
        %v1891 = vrcp.pop %v1561
        %v1892 = vmul.f32 %v1561, %v1891
        %v1893 = vsub.f32 1.0, %v1892
        %v1894 = vmul.f32 %v1891, %v1893
        %v1895 = vadd.f32 %v1891, %v1894
        %vm1896 = vweird.f32 %v1561
        %vm1897 = vweird.f32 %v1891
        %vm1898 = vmor %vm1896, %vm1897
        %v1899 = vsel %vm1898, %v1891, %v1895
        %v1900 = vand.u32 2147483647, %v1561
        %vm1901 = vcmp.eq.f32.partialorder %v1900, 8.507059e+37
        %v1902 = vand.u32 %v1561, 2147483648
        %v1903 = vor.u32 1.1754944e-38, %v1902
        %v1904 = vsel %vm1901, %v1903, %v1899
        %v1905 = vmul.f32 1.0, %v1904
        %v1906 = vrcp.pop %v1562
        %v1907 = vmul.f32 %v1562, %v1906
        %v1908 = vsub.f32 1.0, %v1907
        %v1909 = vmul.f32 %v1906, %v1908
        %v1910 = vadd.f32 %v1906, %v1909
        %vm1911 = vweird.f32 %v1562
        %vm1912 = vweird.f32 %v1906
        %vm1913 = vmor %vm1911, %vm1912
        %v1914 = vsel %vm1913, %v1906, %v1910
        %v1915 = vand.u32 2147483647, %v1562
        %vm1916 = vcmp.eq.f32.partialorder %v1915, 8.507059e+37
        %v1917 = vand.u32 %v1562, 2147483648
        %v1918 = vor.u32 1.1754944e-38, %v1917
        %v1919 = vsel %vm1916, %v1918, %v1914
        %v1920 = vmul.f32 1.0, %v1919
        %v1921 = vrcp.pop %v1563
        %v1922 = vmul.f32 %v1563, %v1921
        %v1923 = vsub.f32 1.0, %v1922
        %v1924 = vmul.f32 %v1921, %v1923
        %v1925 = vadd.f32 %v1921, %v1924
        %vm1926 = vweird.f32 %v1563
        %vm1927 = vweird.f32 %v1921
        %vm1928 = vmor %vm1926, %vm1927
        %v1929 = vsel %vm1928, %v1921, %v1925
        %v1930 = vand.u32 2147483647, %v1563
        %vm1931 = vcmp.eq.f32.partialorder %v1930, 8.507059e+37
        %v1932 = vand.u32 %v1563, 2147483648
        %v1933 = vor.u32 1.1754944e-38, %v1932
        %v1934 = vsel %vm1931, %v1933, %v1929
        %v1935 = vmul.f32 1.0, %v1934
        %v1936 = vrcp.pop %v1564
        %v1937 = vmul.f32 %v1564, %v1936
        %v1938 = vsub.f32 1.0, %v1937
        %v1939 = vmul.f32 %v1936, %v1938
        %v1940 = vadd.f32 %v1936, %v1939
        %vm1941 = vweird.f32 %v1564
        %vm1942 = vweird.f32 %v1936
        %vm1943 = vmor %vm1941, %vm1942
        %v1944 = vsel %vm1943, %v1936, %v1940
        %v1945 = vand.u32 2147483647, %v1564
        %vm1946 = vcmp.eq.f32.partialorder %v1945, 8.507059e+37
        %v1947 = vand.u32 %v1564, 2147483648
        %v1948 = vor.u32 1.1754944e-38, %v1947
        %v1949 = vsel %vm1946, %v1948, %v1944
        %v1950 = vmul.f32 1.0, %v1949
        %v1951 = vrcp.pop %v1565
        %v1952 = vmul.f32 %v1565, %v1951
        %v1953 = vsub.f32 1.0, %v1952
        %v1954 = vmul.f32 %v1951, %v1953
        %v1955 = vadd.f32 %v1951, %v1954
        %vm1956 = vweird.f32 %v1565
        %vm1957 = vweird.f32 %v1951
        %vm1958 = vmor %vm1956, %vm1957
        %v1959 = vsel %vm1958, %v1951, %v1955
        %v1960 = vand.u32 2147483647, %v1565
        %vm1961 = vcmp.eq.f32.partialorder %v1960, 8.507059e+37
        %v1962 = vand.u32 %v1565, 2147483648
        %v1963 = vor.u32 1.1754944e-38, %v1962
        %v1964 = vsel %vm1961, %v1963, %v1959
        %v1965 = vmul.f32 1.0, %v1964
        %v1966 = vrcp.pop %v1566
        %v1967 = vmul.f32 %v1566, %v1966
        %v1968 = vsub.f32 1.0, %v1967
        %v1969 = vmul.f32 %v1966, %v1968
        %v1970 = vadd.f32 %v1966, %v1969
        %vm1971 = vweird.f32 %v1566
        %vm1972 = vweird.f32 %v1966
        %vm1973 = vmor %vm1971, %vm1972
        %v1974 = vsel %vm1973, %v1966, %v1970
        %v1975 = vand.u32 2147483647, %v1566
        %vm1976 = vcmp.eq.f32.partialorder %v1975, 8.507059e+37
        %v1977 = vand.u32 %v1566, 2147483648
        %v1978 = vor.u32 1.1754944e-38, %v1977
        %v1979 = vsel %vm1976, %v1978, %v1974
        %v1980 = vmul.f32 1.0, %v1979
        %v1981 = vrcp.pop %v1567
        %v1982 = vmul.f32 %v1567, %v1981
        %v1983 = vsub.f32 1.0, %v1982
        %v1984 = vmul.f32 %v1981, %v1983
        %v1985 = vadd.f32 %v1981, %v1984
        %vm1986 = vweird.f32 %v1567
        %vm1987 = vweird.f32 %v1981
        %vm1988 = vmor %vm1986, %vm1987
        %v1989 = vsel %vm1988, %v1981, %v1985
        %v1990 = vand.u32 2147483647, %v1567
        %vm1991 = vcmp.eq.f32.partialorder %v1990, 8.507059e+37
        %v1992 = vand.u32 %v1567, 2147483648
        %v1993 = vor.u32 1.1754944e-38, %v1992
        %v1994 = vsel %vm1991, %v1993, %v1989
        %v1995 = vmul.f32 1.0, %v1994
        %v1996 = vrcp.pop %v1568
        %v1997 = vmul.f32 %v1568, %v1996
        %v1998 = vsub.f32 1.0, %v1997
        %v1999 = vmul.f32 %v1996, %v1998
        %v2000 = vadd.f32 %v1996, %v1999
        %vm2001 = vweird.f32 %v1568
        %vm2002 = vweird.f32 %v1996
        %vm2003 = vmor %vm2001, %vm2002
        %v2004 = vsel %vm2003, %v1996, %v2000
        %v2005 = vand.u32 2147483647, %v1568
        %vm2006 = vcmp.eq.f32.partialorder %v2005, 8.507059e+37
        %v2007 = vand.u32 %v1568, 2147483648
        %v2008 = vor.u32 1.1754944e-38, %v2007
        %v2009 = vsel %vm2006, %v2008, %v2004
        %v2010 = vmul.f32 1.0, %v2009
        %v2011 = vrcp.pop %v1569
        %v2012 = vmul.f32 %v1569, %v2011
        %v2013 = vsub.f32 1.0, %v2012
        %v2014 = vmul.f32 %v2011, %v2013
        %v2015 = vadd.f32 %v2011, %v2014
        %vm2016 = vweird.f32 %v1569
        %vm2017 = vweird.f32 %v2011
        %vm2018 = vmor %vm2016, %vm2017
        %v2019 = vsel %vm2018, %v2011, %v2015
        %v2020 = vand.u32 2147483647, %v1569
        %vm2021 = vcmp.eq.f32.partialorder %v2020, 8.507059e+37
        %v2022 = vand.u32 %v1569, 2147483648
        %v2023 = vor.u32 1.1754944e-38, %v2022
        %v2024 = vsel %vm2021, %v2023, %v2019
        %v2025 = vmul.f32 1.0, %v2024
        %v2026 = vrcp.pop %v1570
        %v2027 = vmul.f32 %v1570, %v2026
        %v2028 = vsub.f32 1.0, %v2027
        %v2029 = vmul.f32 %v2026, %v2028
        %v2030 = vadd.f32 %v2026, %v2029
        %vm2031 = vweird.f32 %v1570
        %vm2032 = vweird.f32 %v2026
        %vm2033 = vmor %vm2031, %vm2032
        %v2034 = vsel %vm2033, %v2026, %v2030
        %v2035 = vand.u32 2147483647, %v1570
        %vm2036 = vcmp.eq.f32.partialorder %v2035, 8.507059e+37
        %v2037 = vand.u32 %v1570, 2147483648
        %v2038 = vor.u32 1.1754944e-38, %v2037
        %v2039 = vsel %vm2036, %v2038, %v2034
        %v2040 = vmul.f32 1.0, %v2039
        %v2041 = vrcp.pop %v1571
        %v2042 = vmul.f32 %v1571, %v2041
        %v2043 = vsub.f32 1.0, %v2042
        %v2044 = vmul.f32 %v2041, %v2043
        %v2045 = vadd.f32 %v2041, %v2044
        %vm2046 = vweird.f32 %v1571
        %vm2047 = vweird.f32 %v2041
        %vm2048 = vmor %vm2046, %vm2047
        %v2049 = vsel %vm2048, %v2041, %v2045
        %v2050 = vand.u32 2147483647, %v1571
        %vm2051 = vcmp.eq.f32.partialorder %v2050, 8.507059e+37
        %v2052 = vand.u32 %v1571, 2147483648
        %v2053 = vor.u32 1.1754944e-38, %v2052
        %v2054 = vsel %vm2051, %v2053, %v2049
        %v2055 = vmul.f32 1.0, %v2054
        %v2056 = vrcp.pop %v1572
        %v2057 = vmul.f32 %v1572, %v2056
        %v2058 = vsub.f32 1.0, %v2057
        %v2059 = vmul.f32 %v2056, %v2058
        %v2060 = vadd.f32 %v2056, %v2059
        %vm2061 = vweird.f32 %v1572
        %vm2062 = vweird.f32 %v2056
        %vm2063 = vmor %vm2061, %vm2062
        %v2064 = vsel %vm2063, %v2056, %v2060
        %v2065 = vand.u32 2147483647, %v1572
        %vm2066 = vcmp.eq.f32.partialorder %v2065, 8.507059e+37
        %v2067 = vand.u32 %v1572, 2147483648
        %v2068 = vor.u32 1.1754944e-38, %v2067
        %v2069 = vsel %vm2066, %v2068, %v2064
        %v2070 = vmul.f32 1.0, %v2069
        %v2071 = vrcp.pop %v1573
        %v2072 = vmul.f32 %v1573, %v2071
        %v2073 = vsub.f32 1.0, %v2072
        %v2074 = vmul.f32 %v2071, %v2073
        %v2075 = vadd.f32 %v2071, %v2074
        %vm2076 = vweird.f32 %v1573
        %vm2077 = vweird.f32 %v2071
        %vm2078 = vmor %vm2076, %vm2077
        %v2079 = vsel %vm2078, %v2071, %v2075
        %v2080 = vand.u32 2147483647, %v1573
        %vm2081 = vcmp.eq.f32.partialorder %v2080, 8.507059e+37
        %v2082 = vand.u32 %v1573, 2147483648
        %v2083 = vor.u32 1.1754944e-38, %v2082
        %v2084 = vsel %vm2081, %v2083, %v2079
        %v2085 = vmul.f32 1.0, %v2084
        %v2086 = vrcp.pop %v1574
        %v2087 = vmul.f32 %v1574, %v2086
        %v2088 = vsub.f32 1.0, %v2087
        %v2089 = vmul.f32 %v2086, %v2088
        %v2090 = vadd.f32 %v2086, %v2089
        %vm2091 = vweird.f32 %v1574
        %vm2092 = vweird.f32 %v2086
        %vm2093 = vmor %vm2091, %vm2092
        %v2094 = vsel %vm2093, %v2086, %v2090
        %v2095 = vand.u32 2147483647, %v1574
        %vm2096 = vcmp.eq.f32.partialorder %v2095, 8.507059e+37
        %v2097 = vand.u32 %v1574, 2147483648
        %v2098 = vor.u32 1.1754944e-38, %v2097
        %v2099 = vsel %vm2096, %v2098, %v2094
        %v2100 = vmul.f32 1.0, %v2099
        %v2101 = vrcp.pop %v1575
        %v2102 = vmul.f32 %v1575, %v2101
        %v2103 = vsub.f32 1.0, %v2102
        %v2104 = vmul.f32 %v2101, %v2103
        %v2105 = vadd.f32 %v2101, %v2104
        %vm2106 = vweird.f32 %v1575
        %vm2107 = vweird.f32 %v2101
        %vm2108 = vmor %vm2106, %vm2107
        %v2109 = vsel %vm2108, %v2101, %v2105
        %v2110 = vand.u32 2147483647, %v1575
        %vm2111 = vcmp.eq.f32.partialorder %v2110, 8.507059e+37
        %v2112 = vand.u32 %v1575, 2147483648
        %v2113 = vor.u32 1.1754944e-38, %v2112
        %v2114 = vsel %vm2111, %v2113, %v2109
        %v2115 = vmul.f32 1.0, %v2114
        %v2116 = vrcp.pop %v1576
        %v2117 = vmul.f32 %v1576, %v2116
        %v2118 = vsub.f32 1.0, %v2117
        %v2119 = vmul.f32 %v2116, %v2118
        %v2120 = vadd.f32 %v2116, %v2119
        %vm2121 = vweird.f32 %v1576
        %vm2122 = vweird.f32 %v2116
        %vm2123 = vmor %vm2121, %vm2122
        %v2124 = vsel %vm2123, %v2116, %v2120
        %v2125 = vand.u32 2147483647, %v1576
        %vm2126 = vcmp.eq.f32.partialorder %v2125, 8.507059e+37
        %v2127 = vand.u32 %v1576, 2147483648
        %v2128 = vor.u32 1.1754944e-38, %v2127
        %v2129 = vsel %vm2126, %v2128, %v2124
        %v2130 = vmul.f32 1.0, %v2129
        %v2131 = vrcp.pop %v1577
        %v2132 = vmul.f32 %v1577, %v2131
        %v2133 = vsub.f32 1.0, %v2132
        %v2134 = vmul.f32 %v2131, %v2133
        %v2135 = vadd.f32 %v2131, %v2134
        %vm2136 = vweird.f32 %v1577
        %vm2137 = vweird.f32 %v2131
        %vm2138 = vmor %vm2136, %vm2137
        %v2139 = vsel %vm2138, %v2131, %v2135
        %v2140 = vand.u32 2147483647, %v1577
        %vm2141 = vcmp.eq.f32.partialorder %v2140, 8.507059e+37
        %v2142 = vand.u32 %v1577, 2147483648
        %v2143 = vor.u32 1.1754944e-38, %v2142
        %v2144 = vsel %vm2141, %v2143, %v2139
        %v2145 = vmul.f32 1.0, %v2144
        %v2146 = vrcp.pop %v1578
        %v2147 = vmul.f32 %v1578, %v2146
        %v2148 = vsub.f32 1.0, %v2147
        %v2149 = vmul.f32 %v2146, %v2148
        %v2150 = vadd.f32 %v2146, %v2149
        %vm2151 = vweird.f32 %v1578
        %vm2152 = vweird.f32 %v2146
        %vm2153 = vmor %vm2151, %vm2152
        %v2154 = vsel %vm2153, %v2146, %v2150
        %v2155 = vand.u32 2147483647, %v1578
        %vm2156 = vcmp.eq.f32.partialorder %v2155, 8.507059e+37
        %v2157 = vand.u32 %v1578, 2147483648
        %v2158 = vor.u32 1.1754944e-38, %v2157
        %v2159 = vsel %vm2156, %v2158, %v2154
        %v2160 = vmul.f32 1.0, %v2159
        %v2161 = vrcp.pop %v1579
        %v2162 = vmul.f32 %v1579, %v2161
        %v2163 = vsub.f32 1.0, %v2162
        %v2164 = vmul.f32 %v2161, %v2163
        %v2165 = vadd.f32 %v2161, %v2164
        %vm2166 = vweird.f32 %v1579
        %vm2167 = vweird.f32 %v2161
        %vm2168 = vmor %vm2166, %vm2167
        %v2169 = vsel %vm2168, %v2161, %v2165
        %v2170 = vand.u32 2147483647, %v1579
        %vm2171 = vcmp.eq.f32.partialorder %v2170, 8.507059e+37
        %v2172 = vand.u32 %v1579, 2147483648
        %v2173 = vor.u32 1.1754944e-38, %v2172
        %v2174 = vsel %vm2171, %v2173, %v2169
        %v2175 = vmul.f32 1.0, %v2174
        %v2176 = vrcp.pop %v1580
        %v2177 = vmul.f32 %v1580, %v2176
        %v2178 = vsub.f32 1.0, %v2177
        %v2179 = vmul.f32 %v2176, %v2178
        %v2180 = vadd.f32 %v2176, %v2179
        %vm2181 = vweird.f32 %v1580
        %vm2182 = vweird.f32 %v2176
        %vm2183 = vmor %vm2181, %vm2182
        %v2184 = vsel %vm2183, %v2176, %v2180
        %v2185 = vand.u32 2147483647, %v1580
        %vm2186 = vcmp.eq.f32.partialorder %v2185, 8.507059e+37
        %v2187 = vand.u32 %v1580, 2147483648
        %v2188 = vor.u32 1.1754944e-38, %v2187
        %v2189 = vsel %vm2186, %v2188, %v2184
        %v2190 = vmul.f32 1.0, %v2189
        %v2191 = vrcp.pop %v1581
        %v2192 = vmul.f32 %v1581, %v2191
        %v2193 = vsub.f32 1.0, %v2192
        %v2194 = vmul.f32 %v2191, %v2193
        %v2195 = vadd.f32 %v2191, %v2194
        %vm2196 = vweird.f32 %v1581
        %vm2197 = vweird.f32 %v2191
        %vm2198 = vmor %vm2196, %vm2197
        %v2199 = vsel %vm2198, %v2191, %v2195
        %v2200 = vand.u32 2147483647, %v1581
        %vm2201 = vcmp.eq.f32.partialorder %v2200, 8.507059e+37
        %v2202 = vand.u32 %v1581, 2147483648
        %v2203 = vor.u32 1.1754944e-38, %v2202
        %v2204 = vsel %vm2201, %v2203, %v2199
        %v2205 = vmul.f32 1.0, %v2204
        %v2206 = vrcp.pop %v1582
        %v2207 = vmul.f32 %v1582, %v2206
        %v2208 = vsub.f32 1.0, %v2207
        %v2209 = vmul.f32 %v2206, %v2208
        %v2210 = vadd.f32 %v2206, %v2209
        %vm2211 = vweird.f32 %v1582
        %vm2212 = vweird.f32 %v2206
        %vm2213 = vmor %vm2211, %vm2212
        %v2214 = vsel %vm2213, %v2206, %v2210
        %v2215 = vand.u32 2147483647, %v1582
        %vm2216 = vcmp.eq.f32.partialorder %v2215, 8.507059e+37
        %v2217 = vand.u32 %v1582, 2147483648
        %v2218 = vor.u32 1.1754944e-38, %v2217
        %v2219 = vsel %vm2216, %v2218, %v2214
        %v2220 = vmul.f32 1.0, %v2219
        %v2221 = vrcp.pop %v1583
        %v2222 = vmul.f32 %v1583, %v2221
        %v2223 = vsub.f32 1.0, %v2222
        %v2224 = vmul.f32 %v2221, %v2223
        %v2225 = vadd.f32 %v2221, %v2224
        %vm2226 = vweird.f32 %v1583
        %vm2227 = vweird.f32 %v2221
        %vm2228 = vmor %vm2226, %vm2227
        %v2229 = vsel %vm2228, %v2221, %v2225
        %v2230 = vand.u32 2147483647, %v1583
        %vm2231 = vcmp.eq.f32.partialorder %v2230, 8.507059e+37
        %v2232 = vand.u32 %v1583, 2147483648
        %v2233 = vor.u32 1.1754944e-38, %v2232
        %v2234 = vsel %vm2231, %v2233, %v2229
        %v2235 = vmul.f32 1.0, %v2234
        %v2236 = vrcp.pop %v1584
        %v2237 = vmul.f32 %v1584, %v2236
        %v2238 = vsub.f32 1.0, %v2237
        %v2239 = vmul.f32 %v2236, %v2238
        %v2240 = vadd.f32 %v2236, %v2239
        %vm2241 = vweird.f32 %v1584
        %vm2242 = vweird.f32 %v2236
        %vm2243 = vmor %vm2241, %vm2242
        %v2244 = vsel %vm2243, %v2236, %v2240
        %v2245 = vand.u32 2147483647, %v1584
        %vm2246 = vcmp.eq.f32.partialorder %v2245, 8.507059e+37
        %v2247 = vand.u32 %v1584, 2147483648
        %v2248 = vor.u32 1.1754944e-38, %v2247
        %v2249 = vsel %vm2246, %v2248, %v2244
        %v2250 = vmul.f32 1.0, %v2249
        %v2251 = vrcp.pop %v1585
        %v2252 = vmul.f32 %v1585, %v2251
        %v2253 = vsub.f32 1.0, %v2252
        %v2254 = vmul.f32 %v2251, %v2253
        %v2255 = vadd.f32 %v2251, %v2254
        %vm2256 = vweird.f32 %v1585
        %vm2257 = vweird.f32 %v2251
        %vm2258 = vmor %vm2256, %vm2257
        %v2259 = vsel %vm2258, %v2251, %v2255
        %v2260 = vand.u32 2147483647, %v1585
        %vm2261 = vcmp.eq.f32.partialorder %v2260, 8.507059e+37
        %v2262 = vand.u32 %v1585, 2147483648
        %v2263 = vor.u32 1.1754944e-38, %v2262
        %v2264 = vsel %vm2261, %v2263, %v2259
        %v2265 = vmul.f32 1.0, %v2264
        %v2266 = vrcp.pop %v1586
        %v2267 = vmul.f32 %v1586, %v2266
        %v2268 = vsub.f32 1.0, %v2267
        %v2269 = vmul.f32 %v2266, %v2268
        %v2270 = vadd.f32 %v2266, %v2269
        %vm2271 = vweird.f32 %v1586
        %vm2272 = vweird.f32 %v2266
        %vm2273 = vmor %vm2271, %vm2272
        %v2274 = vsel %vm2273, %v2266, %v2270
        %v2275 = vand.u32 2147483647, %v1586
        %vm2276 = vcmp.eq.f32.partialorder %v2275, 8.507059e+37
        %v2277 = vand.u32 %v1586, 2147483648
        %v2278 = vor.u32 1.1754944e-38, %v2277
        %v2279 = vsel %vm2276, %v2278, %v2274
        %v2280 = vmul.f32 1.0, %v2279
        %v2281 = vrcp.pop %v1587
        %v2282 = vmul.f32 %v1587, %v2281
        %v2283 = vsub.f32 1.0, %v2282
        %v2284 = vmul.f32 %v2281, %v2283
        %v2285 = vadd.f32 %v2281, %v2284
        %vm2286 = vweird.f32 %v1587
        %vm2287 = vweird.f32 %v2281
        %vm2288 = vmor %vm2286, %vm2287
        %v2289 = vsel %vm2288, %v2281, %v2285
        %v2290 = vand.u32 2147483647, %v1587
        %vm2291 = vcmp.eq.f32.partialorder %v2290, 8.507059e+37
        %v2292 = vand.u32 %v1587, 2147483648
        %v2293 = vor.u32 1.1754944e-38, %v2292
        %v2294 = vsel %vm2291, %v2293, %v2289
        %v2295 = vmul.f32 1.0, %v2294
        %v2296 = vrcp.pop %v1588
        %v2297 = vmul.f32 %v1588, %v2296
        %v2298 = vsub.f32 1.0, %v2297
        %v2299 = vmul.f32 %v2296, %v2298
        %v2300 = vadd.f32 %v2296, %v2299
        %vm2301 = vweird.f32 %v1588
        %vm2302 = vweird.f32 %v2296
        %vm2303 = vmor %vm2301, %vm2302
        %v2304 = vsel %vm2303, %v2296, %v2300
        %v2305 = vand.u32 2147483647, %v1588
        %vm2306 = vcmp.eq.f32.partialorder %v2305, 8.507059e+37
        %v2307 = vand.u32 %v1588, 2147483648
        %v2308 = vor.u32 1.1754944e-38, %v2307
        %v2309 = vsel %vm2306, %v2308, %v2304
        %v2310 = vmul.f32 1.0, %v2309
        %v2311 = vrcp.pop %v1589
        %v2312 = vmul.f32 %v1589, %v2311
        %v2313 = vsub.f32 1.0, %v2312
        %v2314 = vmul.f32 %v2311, %v2313
        %v2315 = vadd.f32 %v2311, %v2314
        %vm2316 = vweird.f32 %v1589
        %vm2317 = vweird.f32 %v2311
        %vm2318 = vmor %vm2316, %vm2317
        %v2319 = vsel %vm2318, %v2311, %v2315
        %v2320 = vand.u32 2147483647, %v1589
        %vm2321 = vcmp.eq.f32.partialorder %v2320, 8.507059e+37
        %v2322 = vand.u32 %v1589, 2147483648
        %v2323 = vor.u32 1.1754944e-38, %v2322
        %v2324 = vsel %vm2321, %v2323, %v2319
        %v2325 = vmul.f32 1.0, %v2324
        %v2326 = vrcp.pop %v1590
        %v2327 = vmul.f32 %v1590, %v2326
        %v2328 = vsub.f32 1.0, %v2327
        %v2329 = vmul.f32 %v2326, %v2328
        %v2330 = vadd.f32 %v2326, %v2329
        %vm2331 = vweird.f32 %v1590
        %vm2332 = vweird.f32 %v2326
        %vm2333 = vmor %vm2331, %vm2332
        %v2334 = vsel %vm2333, %v2326, %v2330
        %v2335 = vand.u32 2147483647, %v1590
        %vm2336 = vcmp.eq.f32.partialorder %v2335, 8.507059e+37
        %v2337 = vand.u32 %v1590, 2147483648
        %v2338 = vor.u32 1.1754944e-38, %v2337
        %v2339 = vsel %vm2336, %v2338, %v2334
        %v2340 = vmul.f32 1.0, %v2339
        %v2341 = vrcp.pop %v1591
        %v2342 = vmul.f32 %v1591, %v2341
        %v2343 = vsub.f32 1.0, %v2342
        %v2344 = vmul.f32 %v2341, %v2343
        %v2345 = vadd.f32 %v2341, %v2344
        %vm2346 = vweird.f32 %v1591
        %vm2347 = vweird.f32 %v2341
        %vm2348 = vmor %vm2346, %vm2347
        %v2349 = vsel %vm2348, %v2341, %v2345
        %v2350 = vand.u32 2147483647, %v1591
        %vm2351 = vcmp.eq.f32.partialorder %v2350, 8.507059e+37
        %v2352 = vand.u32 %v1591, 2147483648
        %v2353 = vor.u32 1.1754944e-38, %v2352
        %v2354 = vsel %vm2351, %v2353, %v2349
        %v2355 = vmul.f32 1.0, %v2354
        %v2356 = vrcp.pop %v1592
        %v2357 = vmul.f32 %v1592, %v2356
        %v2358 = vsub.f32 1.0, %v2357
        %v2359 = vmul.f32 %v2356, %v2358
        %v2360 = vadd.f32 %v2356, %v2359
        %vm2361 = vweird.f32 %v1592
        %vm2362 = vweird.f32 %v2356
        %vm2363 = vmor %vm2361, %vm2362
        %v2364 = vsel %vm2363, %v2356, %v2360
        %v2365 = vand.u32 2147483647, %v1592
        %vm2366 = vcmp.eq.f32.partialorder %v2365, 8.507059e+37
        %v2367 = vand.u32 %v1592, 2147483648
        %v2368 = vor.u32 1.1754944e-38, %v2367
        %v2369 = vsel %vm2366, %v2368, %v2364
        %v2370 = vmul.f32 1.0, %v2369
        %v2371 = vrcp.pop %v1593
        %v2372 = vmul.f32 %v1593, %v2371
        %v2373 = vsub.f32 1.0, %v2372
        %v2374 = vmul.f32 %v2371, %v2373
        %v2375 = vadd.f32 %v2371, %v2374
        %vm2376 = vweird.f32 %v1593
        %vm2377 = vweird.f32 %v2371
        %vm2378 = vmor %vm2376, %vm2377
        %v2379 = vsel %vm2378, %v2371, %v2375
        %v2380 = vand.u32 2147483647, %v1593
        %vm2381 = vcmp.eq.f32.partialorder %v2380, 8.507059e+37
        %v2382 = vand.u32 %v1593, 2147483648
        %v2383 = vor.u32 1.1754944e-38, %v2382
        %v2384 = vsel %vm2381, %v2383, %v2379
        %v2385 = vmul.f32 1.0, %v2384
        %v2386 = vrcp.pop %v1594
        %v2387 = vmul.f32 %v1594, %v2386
        %v2388 = vsub.f32 1.0, %v2387
        %v2389 = vmul.f32 %v2386, %v2388
        %v2390 = vadd.f32 %v2386, %v2389
        %vm2391 = vweird.f32 %v1594
        %vm2392 = vweird.f32 %v2386
        %vm2393 = vmor %vm2391, %vm2392
        %v2394 = vsel %vm2393, %v2386, %v2390
        %v2395 = vand.u32 2147483647, %v1594
        %vm2396 = vcmp.eq.f32.partialorder %v2395, 8.507059e+37
        %v2397 = vand.u32 %v1594, 2147483648
        %v2398 = vor.u32 1.1754944e-38, %v2397
        %v2399 = vsel %vm2396, %v2398, %v2394
        %v2400 = vmul.f32 1.0, %v2399
        %v2401 = vrcp.pop %v1595
        %v2402 = vmul.f32 %v1595, %v2401
        %v2403 = vsub.f32 1.0, %v2402
        %v2404 = vmul.f32 %v2401, %v2403
        %v2405 = vadd.f32 %v2401, %v2404
        %vm2406 = vweird.f32 %v1595
        %vm2407 = vweird.f32 %v2401
        %vm2408 = vmor %vm2406, %vm2407
        %v2409 = vsel %vm2408, %v2401, %v2405
        %v2410 = vand.u32 2147483647, %v1595
        %vm2411 = vcmp.eq.f32.partialorder %v2410, 8.507059e+37
        %v2412 = vand.u32 %v1595, 2147483648
        %v2413 = vor.u32 1.1754944e-38, %v2412
        %v2414 = vsel %vm2411, %v2413, %v2409
        %v2415 = vmul.f32 1.0, %v2414
        %v2416 = vrcp.pop %v1596
        %v2417 = vmul.f32 %v1596, %v2416
        %v2418 = vsub.f32 1.0, %v2417
        %v2419 = vmul.f32 %v2416, %v2418
        %v2420 = vadd.f32 %v2416, %v2419
        %vm2421 = vweird.f32 %v1596
        %vm2422 = vweird.f32 %v2416
        %vm2423 = vmor %vm2421, %vm2422
        %v2424 = vsel %vm2423, %v2416, %v2420
        %v2425 = vand.u32 2147483647, %v1596
        %vm2426 = vcmp.eq.f32.partialorder %v2425, 8.507059e+37
        %v2427 = vand.u32 %v1596, 2147483648
        %v2428 = vor.u32 1.1754944e-38, %v2427
        %v2429 = vsel %vm2426, %v2428, %v2424
        %v2430 = vmul.f32 1.0, %v2429
        %v2431 = vrcp.pop %v1597
        %v2432 = vmul.f32 %v1597, %v2431
        %v2433 = vsub.f32 1.0, %v2432
        %v2434 = vmul.f32 %v2431, %v2433
        %v2435 = vadd.f32 %v2431, %v2434
        %vm2436 = vweird.f32 %v1597
        %vm2437 = vweird.f32 %v2431
        %vm2438 = vmor %vm2436, %vm2437
        %v2439 = vsel %vm2438, %v2431, %v2435
        %v2440 = vand.u32 2147483647, %v1597
        %vm2441 = vcmp.eq.f32.partialorder %v2440, 8.507059e+37
        %v2442 = vand.u32 %v1597, 2147483648
        %v2443 = vor.u32 1.1754944e-38, %v2442
        %v2444 = vsel %vm2441, %v2443, %v2439
        %v2445 = vmul.f32 1.0, %v2444
        %v2446 = vrcp.pop %v1598
        %v2447 = vmul.f32 %v1598, %v2446
        %v2448 = vsub.f32 1.0, %v2447
        %v2449 = vmul.f32 %v2446, %v2448
        %v2450 = vadd.f32 %v2446, %v2449
        %vm2451 = vweird.f32 %v1598
        %vm2452 = vweird.f32 %v2446
        %vm2453 = vmor %vm2451, %vm2452
        %v2454 = vsel %vm2453, %v2446, %v2450
        %v2455 = vand.u32 2147483647, %v1598
        %vm2456 = vcmp.eq.f32.partialorder %v2455, 8.507059e+37
        %v2457 = vand.u32 %v1598, 2147483648
        %v2458 = vor.u32 1.1754944e-38, %v2457
        %v2459 = vsel %vm2456, %v2458, %v2454
        %v2460 = vmul.f32 1.0, %v2459
        %v2461 = vrcp.pop %v1599
        %v2462 = vmul.f32 %v1599, %v2461
        %v2463 = vsub.f32 1.0, %v2462
        %v2464 = vmul.f32 %v2461, %v2463
        %v2465 = vadd.f32 %v2461, %v2464
        %vm2466 = vweird.f32 %v1599
        %vm2467 = vweird.f32 %v2461
        %vm2468 = vmor %vm2466, %vm2467
        %v2469 = vsel %vm2468, %v2461, %v2465
        %v2470 = vand.u32 2147483647, %v1599
        %vm2471 = vcmp.eq.f32.partialorder %v2470, 8.507059e+37
        %v2472 = vand.u32 %v1599, 2147483648
        %v2473 = vor.u32 1.1754944e-38, %v2472
        %v2474 = vsel %vm2471, %v2473, %v2469
        %v2475 = vmul.f32 1.0, %v2474
        %v2476 = vrcp.pop %v1600
        %v2477 = vmul.f32 %v1600, %v2476
        %v2478 = vsub.f32 1.0, %v2477
        %v2479 = vmul.f32 %v2476, %v2478
        %v2480 = vadd.f32 %v2476, %v2479
        %vm2481 = vweird.f32 %v1600
        %vm2482 = vweird.f32 %v2476
        %vm2483 = vmor %vm2481, %vm2482
        %v2484 = vsel %vm2483, %v2476, %v2480
        %v2485 = vand.u32 2147483647, %v1600
        %vm2486 = vcmp.eq.f32.partialorder %v2485, 8.507059e+37
        %v2487 = vand.u32 %v1600, 2147483648
        %v2488 = vor.u32 1.1754944e-38, %v2487
        %v2489 = vsel %vm2486, %v2488, %v2484
        %v2490 = vmul.f32 1.0, %v2489
        %v2491 = vrcp.pop %v1601
        %v2492 = vmul.f32 %v1601, %v2491
        %v2493 = vsub.f32 1.0, %v2492
        %v2494 = vmul.f32 %v2491, %v2493
        %v2495 = vadd.f32 %v2491, %v2494
        %vm2496 = vweird.f32 %v1601
        %vm2497 = vweird.f32 %v2491
        %vm2498 = vmor %vm2496, %vm2497
        %v2499 = vsel %vm2498, %v2491, %v2495
        %v2500 = vand.u32 2147483647, %v1601
        %vm2501 = vcmp.eq.f32.partialorder %v2500, 8.507059e+37
        %v2502 = vand.u32 %v1601, 2147483648
        %v2503 = vor.u32 1.1754944e-38, %v2502
        %v2504 = vsel %vm2501, %v2503, %v2499
        %v2505 = vmul.f32 1.0, %v2504
        %v2506 = vrcp.pop %v1602
        %v2507 = vmul.f32 %v1602, %v2506
        %v2508 = vsub.f32 1.0, %v2507
        %v2509 = vmul.f32 %v2506, %v2508
        %v2510 = vadd.f32 %v2506, %v2509
        %vm2511 = vweird.f32 %v1602
        %vm2512 = vweird.f32 %v2506
        %vm2513 = vmor %vm2511, %vm2512
        %v2514 = vsel %vm2513, %v2506, %v2510
        %v2515 = vand.u32 2147483647, %v1602
        %vm2516 = vcmp.eq.f32.partialorder %v2515, 8.507059e+37
        %v2517 = vand.u32 %v1602, 2147483648
        %v2518 = vor.u32 1.1754944e-38, %v2517
        %v2519 = vsel %vm2516, %v2518, %v2514
        %v2520 = vmul.f32 1.0, %v2519
        %v2521 = vrcp.pop %v1603
        %v2522 = vmul.f32 %v1603, %v2521
        %v2523 = vsub.f32 1.0, %v2522
        %v2524 = vmul.f32 %v2521, %v2523
        %v2525 = vadd.f32 %v2521, %v2524
        %vm2526 = vweird.f32 %v1603
        %vm2527 = vweird.f32 %v2521
        %vm2528 = vmor %vm2526, %vm2527
        %v2529 = vsel %vm2528, %v2521, %v2525
        %v2530 = vand.u32 2147483647, %v1603
        %vm2531 = vcmp.eq.f32.partialorder %v2530, 8.507059e+37
        %v2532 = vand.u32 %v1603, 2147483648
        %v2533 = vor.u32 1.1754944e-38, %v2532
        %v2534 = vsel %vm2531, %v2533, %v2529
        %v2535 = vmul.f32 1.0, %v2534
        %v2536 = vrcp.pop %v1604
        %v2537 = vmul.f32 %v1604, %v2536
        %v2538 = vsub.f32 1.0, %v2537
        %v2539 = vmul.f32 %v2536, %v2538
        %v2540 = vadd.f32 %v2536, %v2539
        %vm2541 = vweird.f32 %v1604
        %vm2542 = vweird.f32 %v2536
        %vm2543 = vmor %vm2541, %vm2542
        %v2544 = vsel %vm2543, %v2536, %v2540
        %v2545 = vand.u32 2147483647, %v1604
        %vm2546 = vcmp.eq.f32.partialorder %v2545, 8.507059e+37
        %v2547 = vand.u32 %v1604, 2147483648
        %v2548 = vor.u32 1.1754944e-38, %v2547
        %v2549 = vsel %vm2546, %v2548, %v2544
        %v2550 = vmul.f32 1.0, %v2549
        %v2551 = vrcp.pop %v1605
        %v2552 = vmul.f32 %v1605, %v2551
        %v2553 = vsub.f32 1.0, %v2552
        %v2554 = vmul.f32 %v2551, %v2553
        %v2555 = vadd.f32 %v2551, %v2554
        %vm2556 = vweird.f32 %v1605
        %vm2557 = vweird.f32 %v2551
        %vm2558 = vmor %vm2556, %vm2557
        %v2559 = vsel %vm2558, %v2551, %v2555
        %v2560 = vand.u32 2147483647, %v1605
        %vm2561 = vcmp.eq.f32.partialorder %v2560, 8.507059e+37
        %v2562 = vand.u32 %v1605, 2147483648
        %v2563 = vor.u32 1.1754944e-38, %v2562
        %v2564 = vsel %vm2561, %v2563, %v2559
        %v2565 = vmul.f32 1.0, %v2564
        %v2566 = vmul.f32 %v1040, %v1620
        %v2567 = vmul.f32 %v1081, %v1635
        %v2568 = vmul.f32 %v1122, %v1650
        %v2569 = vmul.f32 %v1163, %v1665
        %v2570 = vmul.f32 %v1204, %v1680
        %v2571 = vmul.f32 %v1245, %v1695
        %v2572 = vmul.f32 %v1286, %v1710
        %v2573 = vmul.f32 %v1327, %v1725
        %v2574 = vmul.f32 %v1043, %v1740
        %v2575 = vmul.f32 %v1084, %v1755
        %v2576 = vmul.f32 %v1125, %v1770
        %v2577 = vmul.f32 %v1166, %v1785
        %v2578 = vmul.f32 %v1207, %v1800
        %v2579 = vmul.f32 %v1248, %v1815
        %v2580 = vmul.f32 %v1289, %v1830
        %v2581 = vmul.f32 %v1330, %v1845
        %v2582 = vmul.f32 %v1046, %v1860
        %v2583 = vmul.f32 %v1087, %v1875
        %v2584 = vmul.f32 %v1128, %v1890
        %v2585 = vmul.f32 %v1169, %v1905
        %v2586 = vmul.f32 %v1210, %v1920
        %v2587 = vmul.f32 %v1251, %v1935
        %v2588 = vmul.f32 %v1292, %v1950
        %v2589 = vmul.f32 %v1333, %v1965
        %v2590 = vmul.f32 %v1049, %v1980
        %v2591 = vmul.f32 %v1090, %v1995
        %v2592 = vmul.f32 %v1131, %v2010
        %v2593 = vmul.f32 %v1172, %v2025
        %v2594 = vmul.f32 %v1213, %v2040
        %v2595 = vmul.f32 %v1254, %v2055
        %v2596 = vmul.f32 %v1295, %v2070
        %v2597 = vmul.f32 %v1336, %v2085
        %v2598 = vmul.f32 %v1052, %v2100
        %v2599 = vmul.f32 %v1093, %v2115
        %v2600 = vmul.f32 %v1134, %v2130
        %v2601 = vmul.f32 %v1175, %v2145
        %v2602 = vmul.f32 %v1216, %v2160
        %v2603 = vmul.f32 %v1257, %v2175
        %v2604 = vmul.f32 %v1298, %v2190
        %v2605 = vmul.f32 %v1339, %v2205
        %v2606 = vmul.f32 %v1055, %v2220
        %v2607 = vmul.f32 %v1096, %v2235
        %v2608 = vmul.f32 %v1137, %v2250
        %v2609 = vmul.f32 %v1178, %v2265
        %v2610 = vmul.f32 %v1219, %v2280
        %v2611 = vmul.f32 %v1260, %v2295
        %v2612 = vmul.f32 %v1301, %v2310
        %v2613 = vmul.f32 %v1342, %v2325
        %v2614 = vmul.f32 %v1058, %v2340
        %v2615 = vmul.f32 %v1099, %v2355
        %v2616 = vmul.f32 %v1140, %v2370
        %v2617 = vmul.f32 %v1181, %v2385
        %v2618 = vmul.f32 %v1222, %v2400
        %v2619 = vmul.f32 %v1263, %v2415
        %v2620 = vmul.f32 %v1304, %v2430
        %v2621 = vmul.f32 %v1345, %v2445
        %v2622 = vmul.f32 %v1061, %v2460
        %v2623 = vmul.f32 %v1102, %v2475
        %v2624 = vmul.f32 %v1143, %v2490
        %v2625 = vmul.f32 %v1184, %v2505
        %v2626 = vmul.f32 %v1225, %v2520
        %v2627 = vmul.f32 %v1266, %v2535
        %v2628 = vmul.f32 %v1307, %v2550
        %v2629 = vmul.f32 %v1348, %v2565
        %v2630 = vld [vmem:[%s3] sm:$0xff]
        %v2631 = vld [vmem:[%s3 + $0x8] sm:$0xff]
        %v2632 = vld [vmem:[%s3 + $0x10] sm:$0xff]
        %v2633 = vld [vmem:[%s3 + $0x18] sm:$0xff]
        %v2634 = vld [vmem:[%s3 + $0x20] sm:$0xff]
        %v2635 = vld [vmem:[%s3 + $0x28] sm:$0xff]
        %v2636 = vld [vmem:[%s3 + $0x30] sm:$0xff]
        %v2637 = vld [vmem:[%s3 + $0x38] sm:$0xff]
        %2639 = vset.pattern.permute.xlu0 0
        %2640 = vperm.xlu0 %2639, %v2630
        %v2641 = vpop.permute.xlu0 %2640
        %2644 = vset.pattern.permute.xlu0 0
        %2645 = vperm.xlu0 %2644, %v2631
        %v2646 = vpop.permute.xlu0 %2645
        %2649 = vset.pattern.permute.xlu0 0
        %2650 = vperm.xlu0 %2649, %v2632
        %v2651 = vpop.permute.xlu0 %2650
        %2654 = vset.pattern.permute.xlu0 0
        %2655 = vperm.xlu0 %2654, %v2633
        %v2656 = vpop.permute.xlu0 %2655
        %2659 = vset.pattern.permute.xlu0 0
        %2660 = vperm.xlu0 %2659, %v2634
        %v2661 = vpop.permute.xlu0 %2660
        %2664 = vset.pattern.permute.xlu0 0
        %2665 = vperm.xlu0 %2664, %v2635
        %v2666 = vpop.permute.xlu0 %2665
        %2669 = vset.pattern.permute.xlu0 0
        %2670 = vperm.xlu0 %2669, %v2636
        %v2671 = vpop.permute.xlu0 %2670
        %2674 = vset.pattern.permute.xlu0 0
        %2675 = vperm.xlu0 %2674, %v2637
        %v2676 = vpop.permute.xlu0 %2675
        %v2678 = vmul.f32 %v2566, %v2641
        %v2679 = vmul.f32 %v2567, %v2641
        %v2680 = vmul.f32 %v2568, %v2641
        %v2681 = vmul.f32 %v2569, %v2641
        %v2682 = vmul.f32 %v2570, %v2641
        %v2683 = vmul.f32 %v2571, %v2641
        %v2684 = vmul.f32 %v2572, %v2641
        %v2685 = vmul.f32 %v2573, %v2641
        %v2686 = vmul.f32 %v2574, %v2646
        %v2687 = vmul.f32 %v2575, %v2646
        %v2688 = vmul.f32 %v2576, %v2646
        %v2689 = vmul.f32 %v2577, %v2646
        %v2690 = vmul.f32 %v2578, %v2646
        %v2691 = vmul.f32 %v2579, %v2646
        %v2692 = vmul.f32 %v2580, %v2646
        %v2693 = vmul.f32 %v2581, %v2646
        %v2694 = vmul.f32 %v2582, %v2651
        %v2695 = vmul.f32 %v2583, %v2651
        %v2696 = vmul.f32 %v2584, %v2651
        %v2697 = vmul.f32 %v2585, %v2651
        %v2698 = vmul.f32 %v2586, %v2651
        %v2699 = vmul.f32 %v2587, %v2651
        %v2700 = vmul.f32 %v2588, %v2651
        %v2701 = vmul.f32 %v2589, %v2651
        %v2702 = vmul.f32 %v2590, %v2656
        %v2703 = vmul.f32 %v2591, %v2656
        %v2704 = vmul.f32 %v2592, %v2656
        %v2705 = vmul.f32 %v2593, %v2656
        %v2706 = vmul.f32 %v2594, %v2656
        %v2707 = vmul.f32 %v2595, %v2656
        %v2708 = vmul.f32 %v2596, %v2656
        %v2709 = vmul.f32 %v2597, %v2656
        %v2710 = vmul.f32 %v2598, %v2661
        %v2711 = vmul.f32 %v2599, %v2661
        %v2712 = vmul.f32 %v2600, %v2661
        %v2713 = vmul.f32 %v2601, %v2661
        %v2714 = vmul.f32 %v2602, %v2661
        %v2715 = vmul.f32 %v2603, %v2661
        %v2716 = vmul.f32 %v2604, %v2661
        %v2717 = vmul.f32 %v2605, %v2661
        %v2718 = vmul.f32 %v2606, %v2666
        %v2719 = vmul.f32 %v2607, %v2666
        %v2720 = vmul.f32 %v2608, %v2666
        %v2721 = vmul.f32 %v2609, %v2666
        %v2722 = vmul.f32 %v2610, %v2666
        %v2723 = vmul.f32 %v2611, %v2666
        %v2724 = vmul.f32 %v2612, %v2666
        %v2725 = vmul.f32 %v2613, %v2666
        %v2726 = vmul.f32 %v2614, %v2671
        %v2727 = vmul.f32 %v2615, %v2671
        %v2728 = vmul.f32 %v2616, %v2671
        %v2729 = vmul.f32 %v2617, %v2671
        %v2730 = vmul.f32 %v2618, %v2671
        %v2731 = vmul.f32 %v2619, %v2671
        %v2732 = vmul.f32 %v2620, %v2671
        %v2733 = vmul.f32 %v2621, %v2671
        %v2734 = vmul.f32 %v2622, %v2676
        %v2735 = vmul.f32 %v2623, %v2676
        %v2736 = vmul.f32 %v2624, %v2676
        %v2737 = vmul.f32 %v2625, %v2676
        %v2738 = vmul.f32 %v2626, %v2676
        %v2739 = vmul.f32 %v2627, %v2676
        %v2740 = vmul.f32 %v2628, %v2676
        %v2741 = vmul.f32 %v2629, %v2676
        %v2742 = vadd.f32 %v2678, %v2686
        %v2743 = vadd.f32 %v2742, %v2694
        %v2744 = vadd.f32 %v2743, %v2702
        %v2745 = vadd.f32 %v2744, %v2710
        %v2746 = vadd.f32 %v2745, %v2718
        %v2747 = vadd.f32 %v2746, %v2726
        %v2748 = vadd.f32 %v2747, %v2734
        %v2749 = vrot.slane %v2748, 4
        %v2750 = vadd.f32 %v2748, %v2749
        %v2751 = vrot.slane %v2750, 2
        %v2752 = vadd.f32 %v2750, %v2751
        %v2753 = vrot.slane %v2752, 1
        %v2754 = vadd.f32 %v2752, %v2753
        %v2755 = vadd.f32 %v2679, %v2687
        %v2756 = vadd.f32 %v2755, %v2695
        %v2757 = vadd.f32 %v2756, %v2703
        %v2758 = vadd.f32 %v2757, %v2711
        %v2759 = vadd.f32 %v2758, %v2719
        %v2760 = vadd.f32 %v2759, %v2727
        %v2761 = vadd.f32 %v2760, %v2735
        %v2762 = vrot.slane %v2761, 4
        %v2763 = vadd.f32 %v2761, %v2762
        %v2764 = vrot.slane %v2763, 2
        %v2765 = vadd.f32 %v2763, %v2764
        %v2766 = vrot.slane %v2765, 1
        %v2767 = vadd.f32 %v2765, %v2766
        %v2768 = vadd.f32 %v2680, %v2688
        %v2769 = vadd.f32 %v2768, %v2696
        %v2770 = vadd.f32 %v2769, %v2704
        %v2771 = vadd.f32 %v2770, %v2712
        %v2772 = vadd.f32 %v2771, %v2720
        %v2773 = vadd.f32 %v2772, %v2728
        %v2774 = vadd.f32 %v2773, %v2736
        %v2775 = vrot.slane %v2774, 4
        %v2776 = vadd.f32 %v2774, %v2775
        %v2777 = vrot.slane %v2776, 2
        %v2778 = vadd.f32 %v2776, %v2777
        %v2779 = vrot.slane %v2778, 1
        %v2780 = vadd.f32 %v2778, %v2779
        %v2781 = vadd.f32 %v2681, %v2689
        %v2782 = vadd.f32 %v2781, %v2697
        %v2783 = vadd.f32 %v2782, %v2705
        %v2784 = vadd.f32 %v2783, %v2713
        %v2785 = vadd.f32 %v2784, %v2721
        %v2786 = vadd.f32 %v2785, %v2729
        %v2787 = vadd.f32 %v2786, %v2737
        %v2788 = vrot.slane %v2787, 4
        %v2789 = vadd.f32 %v2787, %v2788
        %v2790 = vrot.slane %v2789, 2
        %v2791 = vadd.f32 %v2789, %v2790
        %v2792 = vrot.slane %v2791, 1
        %v2793 = vadd.f32 %v2791, %v2792
        %v2794 = vadd.f32 %v2682, %v2690
        %v2795 = vadd.f32 %v2794, %v2698
        %v2796 = vadd.f32 %v2795, %v2706
        %v2797 = vadd.f32 %v2796, %v2714
        %v2798 = vadd.f32 %v2797, %v2722
        %v2799 = vadd.f32 %v2798, %v2730
        %v2800 = vadd.f32 %v2799, %v2738
        %v2801 = vrot.slane %v2800, 4
        %v2802 = vadd.f32 %v2800, %v2801
        %v2803 = vrot.slane %v2802, 2
        %v2804 = vadd.f32 %v2802, %v2803
        %v2805 = vrot.slane %v2804, 1
        %v2806 = vadd.f32 %v2804, %v2805
        %v2807 = vadd.f32 %v2683, %v2691
        %v2808 = vadd.f32 %v2807, %v2699
        %v2809 = vadd.f32 %v2808, %v2707
        %v2810 = vadd.f32 %v2809, %v2715
        %v2811 = vadd.f32 %v2810, %v2723
        %v2812 = vadd.f32 %v2811, %v2731
        %v2813 = vadd.f32 %v2812, %v2739
        %v2814 = vrot.slane %v2813, 4
        %v2815 = vadd.f32 %v2813, %v2814
        %v2816 = vrot.slane %v2815, 2
        %v2817 = vadd.f32 %v2815, %v2816
        %v2818 = vrot.slane %v2817, 1
        %v2819 = vadd.f32 %v2817, %v2818
        %v2820 = vadd.f32 %v2684, %v2692
        %v2821 = vadd.f32 %v2820, %v2700
        %v2822 = vadd.f32 %v2821, %v2708
        %v2823 = vadd.f32 %v2822, %v2716
        %v2824 = vadd.f32 %v2823, %v2724
        %v2825 = vadd.f32 %v2824, %v2732
        %v2826 = vadd.f32 %v2825, %v2740
        %v2827 = vrot.slane %v2826, 4
        %v2828 = vadd.f32 %v2826, %v2827
        %v2829 = vrot.slane %v2828, 2
        %v2830 = vadd.f32 %v2828, %v2829
        %v2831 = vrot.slane %v2830, 1
        %v2832 = vadd.f32 %v2830, %v2831
        %v2833 = vadd.f32 %v2685, %v2693
        %v2834 = vadd.f32 %v2833, %v2701
        %v2835 = vadd.f32 %v2834, %v2709
        %v2836 = vadd.f32 %v2835, %v2717
        %v2837 = vadd.f32 %v2836, %v2725
        %v2838 = vadd.f32 %v2837, %v2733
        %v2839 = vadd.f32 %v2838, %v2741
        %v2840 = vrot.slane %v2839, 4
        %v2841 = vadd.f32 %v2839, %v2840
        %v2842 = vrot.slane %v2841, 2
        %v2843 = vadd.f32 %v2841, %v2842
        %v2844 = vrot.slane %v2843, 1
        %v2845 = vadd.f32 %v2843, %v2844
        %s2846 = sld [smem:[#allocation2]]
        %v2847 = vstv %s2846
        %v2848 = vadd.f32 %v2754, %v2847
        %v2849 = vadd.f32 %v2767, %v2847
        %v2850 = vadd.f32 %v2780, %v2847
        %v2851 = vadd.f32 %v2793, %v2847
        %v2852 = vadd.f32 %v2806, %v2847
        %v2853 = vadd.f32 %v2819, %v2847
        %v2854 = vadd.f32 %v2832, %v2847
        %v2855 = vadd.f32 %v2845, %v2847
        %vm2856 = vcmp.gt.f32.partialorder %v2848, 20.0
        %vm2857 = vcmp.gt.f32.partialorder %v2849, 20.0
        %vm2858 = vcmp.gt.f32.partialorder %v2850, 20.0
        %vm2859 = vcmp.gt.f32.partialorder %v2851, 20.0
        %vm2860 = vcmp.gt.f32.partialorder %v2852, 20.0
        %vm2861 = vcmp.gt.f32.partialorder %v2853, 20.0
        %vm2862 = vcmp.gt.f32.partialorder %v2854, 20.0
        %vm2863 = vcmp.gt.f32.partialorder %v2855, 20.0
        %v2864 = vmin.f32 %v2848, 20.0
        %v2865 = vmin.f32 %v2849, 20.0
        %v2866 = vmin.f32 %v2850, 20.0
        %v2867 = vmin.f32 %v2851, 20.0
        %v2868 = vmin.f32 %v2852, 20.0
        %v2869 = vmin.f32 %v2853, 20.0
        %v2870 = vmin.f32 %v2854, 20.0
        %v2871 = vmin.f32 %v2855, 20.0
        %v2872 = vmul.f32 %v2864, 1.442695
        %v2873 = vpow.pop %v2872
        %v2874 = vmul.f32 %v2865, 1.442695
        %v2875 = vpow.pop %v2874
        %v2876 = vmul.f32 %v2866, 1.442695
        %v2877 = vpow.pop %v2876
        %v2878 = vmul.f32 %v2867, 1.442695
        %v2879 = vpow.pop %v2878
        %v2880 = vmul.f32 %v2868, 1.442695
        %v2881 = vpow.pop %v2880
        %v2882 = vmul.f32 %v2869, 1.442695
        %v2883 = vpow.pop %v2882
        %v2884 = vmul.f32 %v2870, 1.442695
        %v2885 = vpow.pop %v2884
        %v2886 = vmul.f32 %v2871, 1.442695
        %v2887 = vpow.pop %v2886
        %v2888 = vadd.f32 %v2873, 1.0
        %v2889 = vlog2.pop %v2888
        %v2890 = vmul.f32 %v2889, 0.6931472
        %v2891 = vmul.f32 -0.5, %v2873
        %v2892 = vadd.f32 %v2891, 1.0
        %v2893 = vmul.f32 %v2892, %v2873
        %v2894 = vand.u32 2147483647, %v2873
        %vm2895 = vcmp.lt.f32.partialorder %v2894, 0.0004427343
        %v2896 = vsel %vm2895, %v2893, %v2890
        %v2897 = vadd.f32 %v2875, 1.0
        %v2898 = vlog2.pop %v2897
        %v2899 = vmul.f32 %v2898, 0.6931472
        %v2900 = vmul.f32 -0.5, %v2875
        %v2901 = vadd.f32 %v2900, 1.0
        %v2902 = vmul.f32 %v2901, %v2875
        %v2903 = vand.u32 2147483647, %v2875
        %vm2904 = vcmp.lt.f32.partialorder %v2903, 0.0004427343
        %v2905 = vsel %vm2904, %v2902, %v2899
        %v2906 = vadd.f32 %v2877, 1.0
        %v2907 = vlog2.pop %v2906
        %v2908 = vmul.f32 %v2907, 0.6931472
        %v2909 = vmul.f32 -0.5, %v2877
        %v2910 = vadd.f32 %v2909, 1.0
        %v2911 = vmul.f32 %v2910, %v2877
        %v2912 = vand.u32 2147483647, %v2877
        %vm2913 = vcmp.lt.f32.partialorder %v2912, 0.0004427343
        %v2914 = vsel %vm2913, %v2911, %v2908
        %v2915 = vadd.f32 %v2879, 1.0
        %v2916 = vlog2.pop %v2915
        %v2917 = vmul.f32 %v2916, 0.6931472
        %v2918 = vmul.f32 -0.5, %v2879
        %v2919 = vadd.f32 %v2918, 1.0
        %v2920 = vmul.f32 %v2919, %v2879
        %v2921 = vand.u32 2147483647, %v2879
        %vm2922 = vcmp.lt.f32.partialorder %v2921, 0.0004427343
        %v2923 = vsel %vm2922, %v2920, %v2917
        %v2924 = vadd.f32 %v2881, 1.0
        %v2925 = vlog2.pop %v2924
        %v2926 = vmul.f32 %v2925, 0.6931472
        %v2927 = vmul.f32 -0.5, %v2881
        %v2928 = vadd.f32 %v2927, 1.0
        %v2929 = vmul.f32 %v2928, %v2881
        %v2930 = vand.u32 2147483647, %v2881
        %vm2931 = vcmp.lt.f32.partialorder %v2930, 0.0004427343
        %v2932 = vsel %vm2931, %v2929, %v2926
        %v2933 = vadd.f32 %v2883, 1.0
        %v2934 = vlog2.pop %v2933
        %v2935 = vmul.f32 %v2934, 0.6931472
        %v2936 = vmul.f32 -0.5, %v2883
        %v2937 = vadd.f32 %v2936, 1.0
        %v2938 = vmul.f32 %v2937, %v2883
        %v2939 = vand.u32 2147483647, %v2883
        %vm2940 = vcmp.lt.f32.partialorder %v2939, 0.0004427343
        %v2941 = vsel %vm2940, %v2938, %v2935
        %v2942 = vadd.f32 %v2885, 1.0
        %v2943 = vlog2.pop %v2942
        %v2944 = vmul.f32 %v2943, 0.6931472
        %v2945 = vmul.f32 -0.5, %v2885
        %v2946 = vadd.f32 %v2945, 1.0
        %v2947 = vmul.f32 %v2946, %v2885
        %v2948 = vand.u32 2147483647, %v2885
        %vm2949 = vcmp.lt.f32.partialorder %v2948, 0.0004427343
        %v2950 = vsel %vm2949, %v2947, %v2944
        %v2951 = vadd.f32 %v2887, 1.0
        %v2952 = vlog2.pop %v2951
        %v2953 = vmul.f32 %v2952, 0.6931472
        %v2954 = vmul.f32 -0.5, %v2887
        %v2955 = vadd.f32 %v2954, 1.0
        %v2956 = vmul.f32 %v2955, %v2887
        %v2957 = vand.u32 2147483647, %v2887
        %vm2958 = vcmp.lt.f32.partialorder %v2957, 0.0004427343
        %v2959 = vsel %vm2958, %v2956, %v2953
        %v2960 = vsel %vm2856, %v2848, %v2896
        %v2961 = vsel %vm2857, %v2849, %v2905
        %v2962 = vsel %vm2858, %v2850, %v2914
        %v2963 = vsel %vm2859, %v2851, %v2923
        %v2964 = vsel %vm2860, %v2852, %v2932
        %v2965 = vsel %vm2861, %v2853, %v2941
        %v2966 = vsel %vm2862, %v2854, %v2950
        %v2967 = vsel %vm2863, %v2855, %v2959
        %s2968 = sld [smem:[#allocation3]]
        %v2969 = vstv %s2968
        %v2970 = vadd.f32 %v2960, %v2969
        %v2971 = vadd.f32 %v2961, %v2969
        %v2972 = vadd.f32 %v2962, %v2969
        %v2973 = vadd.f32 %v2963, %v2969
        %v2974 = vadd.f32 %v2964, %v2969
        %v2975 = vadd.f32 %v2965, %v2969
        %v2976 = vadd.f32 %v2966, %v2969
        %v2977 = vadd.f32 %v2967, %v2969
        %v2978 = vmax.f32 %v2970, 1e-07
        %v2979 = vmax.f32 %v2971, 1e-07
        %v2980 = vmax.f32 %v2972, 1e-07
        %v2981 = vmax.f32 %v2973, 1e-07
        %v2982 = vmax.f32 %v2974, 1e-07
        %v2983 = vmax.f32 %v2975, 1e-07
        %v2984 = vmax.f32 %v2976, 1e-07
        %v2985 = vmax.f32 %v2977, 1e-07
        %v2986 = vld [vmem:[%s298] sm:$0xff]
        %v2987 = vmul.f32 %v2986, 0.9999998
        %v2988 = vadd.f32 %v2987, 1e-07
        %v2989 = vlog2.pop %v2988
        %v2990 = vmul.f32 %v2989, 0.6931472
        %v2991 = vsub.f32 0.0, %v2990
        %v2992 = vrcp.pop %v2978
        %v2993 = vrcp.pop %v2979
        %v2994 = vrcp.pop %v2980
        %v2995 = vrcp.pop %v2981
        %v2996 = vrcp.pop %v2982
        %v2997 = vrcp.pop %v2983
        %v2998 = vrcp.pop %v2984
        %v2999 = vrcp.pop %v2985
        %v3008 = vrot.slane %v2993, 7
        %v3009 = vrot.slane %v2994, 6
        %v3010 = vrot.slane %v2995, 5
        %v3011 = vrot.slane %v2996, 4
        %v3012 = vrot.slane %v2997, 3
        %v3013 = vrot.slane %v2998, 2
        %v3014 = vrot.slane %v2999, 1
        %vm3015 = vcmask 1040384
        %v3016 = vsel %vm3015, %v2992, %v3008
        %vm3017 = vcmask 1042434
        %v3018 = vsel %vm3017, %v3009, %v3010
        %vm3019 = vcmask 1041408
        %v3020 = vsel %vm3019, %v3016, %v3018
        %vm3021 = vcmask 1044484
        %v3022 = vsel %vm3021, %v3011, %v3012
        %vm3023 = vcmask 1046534
        %v3024 = vsel %vm3023, %v3013, %v3014
        %vm3025 = vcmask 1045508
        %v3026 = vsel %vm3025, %v3022, %v3024
        %vm3027 = vcmask 1043456
        %v3028 = vsel %vm3027, %v3020, %v3026
        %v3030 = vmul.f32 %v2991, %v3028
        %3031 = vst [vmem:[%s288] sm:$0xff] %v3030
        %s3032 = sand.u32 %s188, 1
        %s3033 = scalar_lea.sflag [#allocation5], %s3032
        %s3034 = sand.u32 %s188, 1
        %s3035 = smul.addr %s3034, 8
        %s3036 = scalar_lea.vmem [#allocation4], %s3035
        // Predicated region
        $region49: #{tpu_custom_call.1} parent=47 // pred_check
          %p3037 = pneg %p198
        $region50: #{tpu_custom_call.1} parent=47 // pred_check_branch
          %3039 = sbr.rel (%p3037) target = $region52
        $region51: #{tpu_custom_call.1} parent=47 // pred_region
          %s3040 = smul.u32 8, %s23
          %3042 = vsyncadd %s3033, 0
          %s3043 = scalar_lea.hbm %s7, %s3040
          %s3045 = sshll.u32 %s3036, 4
          %s3046 = int_to_ptr.vmem [resolvable:$true] %s3045
          %s3047 = sshll.u32 %s3043, 4
          %s3048 = int_to_ptr.hbm [resolvable:$true] %s3047
          %3050 = dma.vmem_to_hbm [thread:$0]  %s3046, 128, %s3048, %s3033
        $region52: #{tpu_custom_call.1} parent=47 // pred_fallthru
          _
      $region48: #{tpu_custom_call.1} parent=5 // pred_fallthru
        _
      %p3051 = scmp.le.s32.totalorder 2, %s18
      // Predicated region
      $region53: #{tpu_custom_call.1} parent=5 // pred_check
        %p3052 = pneg %p3051
      $region54: #{tpu_custom_call.1} parent=5 // pred_check_branch
        %3054 = sbr.rel (%p3052) target = $region56
      $region55: #{tpu_custom_call.1} parent=5 // pred_region
        %s3055 = ssub.s32 %s18, 2
        // Predicated region
        $region57: #{tpu_custom_call.1} parent=55 // pred_check
          %p3056 = pneg %p204
        $region58: #{tpu_custom_call.1} parent=55 // pred_check_branch
          %3058 = sbr.rel (%p3056) target = $region60
        $region59: #{tpu_custom_call.1} parent=55 // pred_region
          %s3059 = sand.u32 %s189, 1
          %s3060 = scalar_lea.sflag [#allocation5], %s3059
          %s3061 = sand.u32 %s189, 1
          %s3062 = smul.addr %s3061, 8
          %s3063 = scalar_lea.vmem [#allocation4], %s3062
          %3065 = dma.done %s3060, 128
        $region60: #{tpu_custom_call.1} parent=55 // pred_fallthru
          _
      $region56: #{tpu_custom_call.1} parent=5 // pred_fallthru
        _
    $region6: #{tpu_custom_call.1} parent=1 // loop_footer
      %s22 = sadd.s32 1, %s18
    $region7: #{tpu_custom_call.1} parent=1 // loop_footer_branch
      %17 = sbr.rel target = $region3
    $region8: #{tpu_custom_call.1} parent=1 // loop_exit
      _
    %3066 = vsyncpa [#allocation5], 1
    %s3067 = scalar_lea.sflag [#allocation5], 1
    %3068 = vsyncpa %s3067, 1

</llo_original>
